<compile_context>
chip_gen: v7x
topology: tpu7x:2x2x1
jax: 0.10.0
libtpu: 0.0.40
codegen_flags: <defaults>
</compile_context>

<pallas_src>
import jax
import jax.numpy as jnp
import numpy as np
from jax.experimental import pallas as pl
from jax.experimental.pallas import tpu as pltpu

K = 7        # conv kernel size
PAD = 3      # padding for kernel_size = 7


def _make_kernel(H, W):
    HW = H * W

    def kernel(w_ref, x_ref, o_ref):
        # w_ref: SMEM (2*49,) f32 flat OIHW weights, idx = c*49 + ky*7 + kx
        # x_ref: VMEM (Nb, C, HW)   -- lane-dense spatial layout
        # o_ref: VMEM (Nb, 1, HW)
        Nb, C, _ = x_ref.shape

        # ---- fused single sweep over channels: running sum + running max ----
        x0 = x_ref[:, 0, :].astype(jnp.float32)            # (Nb, HW)
        s = x0
        mx = x0
        for c in range(1, C):
            xc = x_ref[:, c, :].astype(jnp.float32)
            s = s + xc
            mx = jnp.maximum(mx, xc)
        avg = s * (1.0 / C)

        # Flat-position helpers for static border masks.
        pos = jax.lax.broadcasted_iota(jnp.int32, (1, HW), 1)   # p = y*W + x
        col = pos % W                                           # x coordinate

        # ---- column stage: x-shifted, x-border-masked maps (one per dx) ----
        def shift_cols(a, dx):
            if dx == 0:
                return a
            rolled = pltpu.roll(a, (-dx) % HW, axis=1)
            if dx > 0:
                valid = col < (W - dx)
            else:
                valid = col >= (-dx)
            return jnp.where(valid, rolled, 0.0)

        a_sh = []
        m_sh = []
        for kx in range(K):
            dx = kx - PAD
            a_sh.append(shift_cols(avg, dx))
            m_sh.append(shift_cols(mx, dx))

        # ---- row stage: weighted combine per dy, then y shift + y mask ----
        rows = []
        for ky in range(K):
            dy = ky - PAD
            # two independent accumulation chains (avg taps / max taps)
            b_a = w_ref[ky * K] * a_sh[0]
            b_m = w_ref[K * K + ky * K] * m_sh[0]
            for kx in range(1, K):
                b_a = b_a + w_ref[ky * K + kx] * a_sh[kx]
                b_m = b_m + w_ref[K * K + ky * K + kx] * m_sh[kx]
            b = b_a + b_m
            if dy != 0:
                b = pltpu.roll(b, (-dy * W) % HW, axis=1)
                if dy > 0:
                    valid = pos < (H - dy) * W
                else:
                    valid = pos >= (-dy) * W
                b = jnp.where(valid, b, 0.0)
            rows.append(b)

        # balanced tree sum over the 7 independent row contributions (ILP)
        t01 = rows[0] + rows[1]
        t23 = rows[2] + rows[3]
        t45 = rows[4] + rows[5]
        acc = (t01 + t23) + (t45 + rows[6])

        o_ref[:, 0, :] = jax.nn.sigmoid(acc).astype(o_ref.dtype)

    return kernel


def spatial_attention(x, w, *, block_n=None):
    """x: (N, C, H, W) f32, w: (1, 2, 7, 7) f32 conv weight (no bias)."""
    N, C, H, W = x.shape
    HW = H * W
    x_flat = x.reshape(N, C, HW)                 # lane-dense spatial layout (free reshape)
    w_flat = w.reshape(-1).astype(jnp.float32)   # (98,) scalars for SMEM

    if block_n is None:
        # Keep the double-buffered input block comfortably inside the default
        # scoped-VMEM limit on every generation (v7x has only 64 MiB physical).
        bytes_per_batch_elem = C * HW * 4
        block_n = max(1, min(N, (4 * 1024 * 1024) // max(bytes_per_batch_elem, 1)))
        if N >= 2:
            # keep >=2 parallel grid steps so both v7x TensorCores get work
            block_n = min(block_n, max(1, N // 2))
    grid_n = pl.cdiv(N, block_n)

    cost = pl.CostEstimate(
        flops=int(N * HW * (2 * C + 4 * K * K + 8)),
        transcendentals=int(N * HW),
        bytes_accessed=int(N * C * HW * 4 + N * HW * 4 + 2 * K * K * 4),
    )

    out_flat = pl.pallas_call(
        _make_kernel(H, W),
        out_shape=jax.ShapeDtypeStruct((N, 1, HW), x.dtype),
        grid=(grid_n,),
        in_specs=[
            pl.BlockSpec(memory_space=pltpu.MemorySpace.SMEM),        # conv weights
            pl.BlockSpec((block_n, C, HW), lambda n: (n, 0, 0)),      # x tile
        ],
        out_specs=pl.BlockSpec((block_n, 1, HW), lambda n: (n, 0, 0)),
        compiler_params=pltpu.CompilerParams(
            dimension_semantics=("parallel",)),
        cost_estimate=cost,
    )(w_flat, x_flat)

    return out_flat.reshape(N, 1, H, W)


def reference(x, w):
    """Pure-JAX reference matching the PyTorch forward."""
    avg = jnp.mean(x, axis=1, keepdims=True)
    mx = jnp.max(x, axis=1, keepdims=True)
    xc = jnp.concatenate([avg, mx], axis=1)           # (N, 2, H, W)
    y = jax.lax.conv_general_dilated(
        xc, w, window_strides=(1, 1), padding=((PAD, PAD), (PAD, PAD)),
        dimension_numbers=("NCHW", "OIHW", "NCHW"),
        precision=jax.lax.Precision.HIGHEST)
    return jax.nn.sigmoid(y)


if __name__ == "__main__":
    key = jax.random.PRNGKey(0)
    k_x, k_w = jax.random.split(key)

    # Small shapes consistent with the module: N=2, C=4, H=W=16
    x = jax.random.normal(k_x, (2, 4, 16, 16), dtype=jnp.float32)
    # Deterministic synthetic conv1 weight: (out=1, in=2, 7, 7), no bias
    w = jax.random.normal(k_w, (1, 2, 7, 7), dtype=jnp.float32) * 0.1

    out = spatial_attention(x, w)
    out = jax.block_until_ready(out)

    ref = reference(x, w)
    assert out.shape == (2, 1, 16, 16)
    np.testing.assert_allclose(np.asarray(out), np.asarray(ref),
                               atol=1e-5, rtol=1e-5)
    print("KERNEL_OK")
</pallas_src>

<mosaic_0001>
module attributes {stable_mosaic.version = 11 : i64} {
  func.func @kernel(%arg0: i32, %arg1: memref<98xf32, #tpu.memory_space<smem>>, %arg2: memref<1x4x256xf32, #tpu.memory_space<vmem>>, %arg3: memref<1x1x256xf32, #tpu.memory_space<vmem>>) attributes {dimension_semantics = [#tpu.dimension_semantics<parallel>], iteration_bounds = array<i64: 2>, scalar_prefetch = 0 : i64, scratch_operands = 0 : i64, tpu.core_type = #tpu.core_type<tc>, window_params = [{transform_indices = @transform_0, window_bounds = array<i64: 98>}, {transform_indices = @transform_1, window_bounds = array<i64: 1, 4, 256>}, {transform_indices = @transform_2, window_bounds = array<i64: 1, 1, 256>}]} {
    %c0 = arith.constant 0 : index
    %c0_0 = arith.constant 0 : index
    %c0_1 = arith.constant 0 : index
    %0 = vector.load %arg2[%c0, %c0_0, %c0_1] : memref<1x4x256xf32, #tpu.memory_space<vmem>>, vector<1x1x256xf32>
    %1 = vector.shape_cast %0 : vector<1x1x256xf32> to vector<1x256xf32>
    %c0_2 = arith.constant 0 : index
    %c1 = arith.constant 1 : index
    %c0_3 = arith.constant 0 : index
    %2 = vector.load %arg2[%c0_2, %c1, %c0_3] : memref<1x4x256xf32, #tpu.memory_space<vmem>>, vector<1x1x256xf32>
    %3 = vector.shape_cast %2 : vector<1x1x256xf32> to vector<1x256xf32>
    %4 = arith.addf %1, %3 : vector<1x256xf32>
    %5 = arith.maximumf %1, %3 : vector<1x256xf32>
    %c0_4 = arith.constant 0 : index
    %c2 = arith.constant 2 : index
    %c0_5 = arith.constant 0 : index
    %6 = vector.load %arg2[%c0_4, %c2, %c0_5] : memref<1x4x256xf32, #tpu.memory_space<vmem>>, vector<1x1x256xf32>
    %7 = vector.shape_cast %6 : vector<1x1x256xf32> to vector<1x256xf32>
    %8 = arith.addf %4, %7 : vector<1x256xf32>
    %9 = arith.maximumf %5, %7 : vector<1x256xf32>
    %c0_6 = arith.constant 0 : index
    %c3 = arith.constant 3 : index
    %c0_7 = arith.constant 0 : index
    %10 = vector.load %arg2[%c0_6, %c3, %c0_7] : memref<1x4x256xf32, #tpu.memory_space<vmem>>, vector<1x1x256xf32>
    %11 = vector.shape_cast %10 : vector<1x1x256xf32> to vector<1x256xf32>
    %12 = arith.addf %8, %11 : vector<1x256xf32>
    %13 = arith.maximumf %9, %11 : vector<1x256xf32>
    %cst = arith.constant 2.500000e-01 : f32
    %14 = vector.broadcast %cst : f32 to vector<1x256xf32>
    %15 = arith.mulf %12, %14 : vector<1x256xf32>
    %16 = tpu.iota {dimensions = array<i32: 1>} : vector<1x256xi32>
    %c16_i32 = arith.constant 16 : i32
    %c0_i32 = arith.constant 0 : i32
    %17 = arith.cmpi eq, %c16_i32, %c0_i32 : i32
    %c1_i32 = arith.constant 1 : i32
    %18 = arith.select %17, %c1_i32, %c16_i32 : i32
    %19 = vector.broadcast %18 : i32 to vector<1x256xi32>
    %20 = arith.remsi %16, %19 : vector<1x256xi32>
    %c0_i32_8 = arith.constant 0 : i32
    %21 = vector.broadcast %c0_i32_8 : i32 to vector<1x256xi32>
    %22 = arith.cmpi ne, %20, %21 : vector<1x256xi32>
    %c0_i32_9 = arith.constant 0 : i32
    %23 = vector.broadcast %c0_i32_9 : i32 to vector<1x256xi32>
    %24 = arith.cmpi slt, %20, %23 : vector<1x256xi32>
    %c0_i32_10 = arith.constant 0 : i32
    %25 = arith.cmpi slt, %18, %c0_i32_10 : i32
    %26 = vector.broadcast %25 : i1 to vector<1x256xi1>
    %27 = vector.broadcast %26 : vector<1x256xi1> to vector<1x256xi1>
    %28 = arith.xori %24, %27 : vector<1x256xi1>
    %29 = arith.andi %28, %22 : vector<1x256xi1>
    %30 = vector.broadcast %18 : i32 to vector<1x256xi32>
    %31 = arith.addi %20, %30 : vector<1x256xi32>
    %32 = arith.select %29, %31, %20 : vector<1x256xi1>, vector<1x256xi32>
    %c3_i32 = arith.constant 3 : i32
    %33 = tpu.dynamic_rotate %15 by %c3_i32 dim 1 : vector<1x256xf32>, i32 -> vector<1x256xf32>
    %c3_i32_11 = arith.constant 3 : i32
    %34 = vector.broadcast %c3_i32_11 : i32 to vector<1x256xi32>
    %35 = arith.cmpi sge, %32, %34 : vector<1x256xi32>
    %cst_12 = arith.constant 0.000000e+00 : f32
    %36 = vector.broadcast %cst_12 : f32 to vector<1x256xf32>
    %37 = arith.select %35, %33, %36 : vector<1x256xi1>, vector<1x256xf32>
    %c3_i32_13 = arith.constant 3 : i32
    %38 = tpu.dynamic_rotate %13 by %c3_i32_13 dim 1 : vector<1x256xf32>, i32 -> vector<1x256xf32>
    %c3_i32_14 = arith.constant 3 : i32
    %39 = vector.broadcast %c3_i32_14 : i32 to vector<1x256xi32>
    %40 = arith.cmpi sge, %32, %39 : vector<1x256xi32>
    %cst_15 = arith.constant 0.000000e+00 : f32
    %41 = vector.broadcast %cst_15 : f32 to vector<1x256xf32>
    %42 = arith.select %40, %38, %41 : vector<1x256xi1>, vector<1x256xf32>
    %c2_i32 = arith.constant 2 : i32
    %43 = tpu.dynamic_rotate %15 by %c2_i32 dim 1 : vector<1x256xf32>, i32 -> vector<1x256xf32>
    %c2_i32_16 = arith.constant 2 : i32
    %44 = vector.broadcast %c2_i32_16 : i32 to vector<1x256xi32>
    %45 = arith.cmpi sge, %32, %44 : vector<1x256xi32>
    %cst_17 = arith.constant 0.000000e+00 : f32
    %46 = vector.broadcast %cst_17 : f32 to vector<1x256xf32>
    %47 = arith.select %45, %43, %46 : vector<1x256xi1>, vector<1x256xf32>
    %c2_i32_18 = arith.constant 2 : i32
    %48 = tpu.dynamic_rotate %13 by %c2_i32_18 dim 1 : vector<1x256xf32>, i32 -> vector<1x256xf32>
    %c2_i32_19 = arith.constant 2 : i32
    %49 = vector.broadcast %c2_i32_19 : i32 to vector<1x256xi32>
    %50 = arith.cmpi sge, %32, %49 : vector<1x256xi32>
    %cst_20 = arith.constant 0.000000e+00 : f32
    %51 = vector.broadcast %cst_20 : f32 to vector<1x256xf32>
    %52 = arith.select %50, %48, %51 : vector<1x256xi1>, vector<1x256xf32>
    %c1_i32_21 = arith.constant 1 : i32
    %53 = tpu.dynamic_rotate %15 by %c1_i32_21 dim 1 : vector<1x256xf32>, i32 -> vector<1x256xf32>
    %c1_i32_22 = arith.constant 1 : i32
    %54 = vector.broadcast %c1_i32_22 : i32 to vector<1x256xi32>
    %55 = arith.cmpi sge, %32, %54 : vector<1x256xi32>
    %cst_23 = arith.constant 0.000000e+00 : f32
    %56 = vector.broadcast %cst_23 : f32 to vector<1x256xf32>
    %57 = arith.select %55, %53, %56 : vector<1x256xi1>, vector<1x256xf32>
    %c1_i32_24 = arith.constant 1 : i32
    %58 = tpu.dynamic_rotate %13 by %c1_i32_24 dim 1 : vector<1x256xf32>, i32 -> vector<1x256xf32>
    %c1_i32_25 = arith.constant 1 : i32
    %59 = vector.broadcast %c1_i32_25 : i32 to vector<1x256xi32>
    %60 = arith.cmpi sge, %32, %59 : vector<1x256xi32>
    %cst_26 = arith.constant 0.000000e+00 : f32
    %61 = vector.broadcast %cst_26 : f32 to vector<1x256xf32>
    %62 = arith.select %60, %58, %61 : vector<1x256xi1>, vector<1x256xf32>
    %c255_i32 = arith.constant 255 : i32
    %63 = tpu.dynamic_rotate %15 by %c255_i32 dim 1 : vector<1x256xf32>, i32 -> vector<1x256xf32>
    %c15_i32 = arith.constant 15 : i32
    %64 = vector.broadcast %c15_i32 : i32 to vector<1x256xi32>
    %65 = arith.cmpi slt, %32, %64 : vector<1x256xi32>
    %cst_27 = arith.constant 0.000000e+00 : f32
    %66 = vector.broadcast %cst_27 : f32 to vector<1x256xf32>
    %67 = arith.select %65, %63, %66 : vector<1x256xi1>, vector<1x256xf32>
    %c255_i32_28 = arith.constant 255 : i32
    %68 = tpu.dynamic_rotate %13 by %c255_i32_28 dim 1 : vector<1x256xf32>, i32 -> vector<1x256xf32>
    %c15_i32_29 = arith.constant 15 : i32
    %69 = vector.broadcast %c15_i32_29 : i32 to vector<1x256xi32>
    %70 = arith.cmpi slt, %32, %69 : vector<1x256xi32>
    %cst_30 = arith.constant 0.000000e+00 : f32
    %71 = vector.broadcast %cst_30 : f32 to vector<1x256xf32>
    %72 = arith.select %70, %68, %71 : vector<1x256xi1>, vector<1x256xf32>
    %c254_i32 = arith.constant 254 : i32
    %73 = tpu.dynamic_rotate %15 by %c254_i32 dim 1 : vector<1x256xf32>, i32 -> vector<1x256xf32>
    %c14_i32 = arith.constant 14 : i32
    %74 = vector.broadcast %c14_i32 : i32 to vector<1x256xi32>
    %75 = arith.cmpi slt, %32, %74 : vector<1x256xi32>
    %cst_31 = arith.constant 0.000000e+00 : f32
    %76 = vector.broadcast %cst_31 : f32 to vector<1x256xf32>
    %77 = arith.select %75, %73, %76 : vector<1x256xi1>, vector<1x256xf32>
    %c254_i32_32 = arith.constant 254 : i32
    %78 = tpu.dynamic_rotate %13 by %c254_i32_32 dim 1 : vector<1x256xf32>, i32 -> vector<1x256xf32>
    %c14_i32_33 = arith.constant 14 : i32
    %79 = vector.broadcast %c14_i32_33 : i32 to vector<1x256xi32>
    %80 = arith.cmpi slt, %32, %79 : vector<1x256xi32>
    %cst_34 = arith.constant 0.000000e+00 : f32
    %81 = vector.broadcast %cst_34 : f32 to vector<1x256xf32>
    %82 = arith.select %80, %78, %81 : vector<1x256xi1>, vector<1x256xf32>
    %c253_i32 = arith.constant 253 : i32
    %83 = tpu.dynamic_rotate %15 by %c253_i32 dim 1 : vector<1x256xf32>, i32 -> vector<1x256xf32>
    %c13_i32 = arith.constant 13 : i32
    %84 = vector.broadcast %c13_i32 : i32 to vector<1x256xi32>
    %85 = arith.cmpi slt, %32, %84 : vector<1x256xi32>
    %cst_35 = arith.constant 0.000000e+00 : f32
    %86 = vector.broadcast %cst_35 : f32 to vector<1x256xf32>
    %87 = arith.select %85, %83, %86 : vector<1x256xi1>, vector<1x256xf32>
    %c253_i32_36 = arith.constant 253 : i32
    %88 = tpu.dynamic_rotate %13 by %c253_i32_36 dim 1 : vector<1x256xf32>, i32 -> vector<1x256xf32>
    %c13_i32_37 = arith.constant 13 : i32
    %89 = vector.broadcast %c13_i32_37 : i32 to vector<1x256xi32>
    %90 = arith.cmpi slt, %32, %89 : vector<1x256xi32>
    %cst_38 = arith.constant 0.000000e+00 : f32
    %91 = vector.broadcast %cst_38 : f32 to vector<1x256xf32>
    %92 = arith.select %90, %88, %91 : vector<1x256xi1>, vector<1x256xf32>
    %c0_39 = arith.constant 0 : index
    %93 = memref.load %arg1[%c0_39] : memref<98xf32, #tpu.memory_space<smem>>
    %94 = vector.broadcast %93 : f32 to vector<1x256xf32>
    %95 = arith.mulf %94, %37 : vector<1x256xf32>
    %c49 = arith.constant 49 : index
    %96 = memref.load %arg1[%c49] : memref<98xf32, #tpu.memory_space<smem>>
    %97 = vector.broadcast %96 : f32 to vector<1x256xf32>
    %98 = arith.mulf %97, %42 : vector<1x256xf32>
    %c1_40 = arith.constant 1 : index
    %99 = memref.load %arg1[%c1_40] : memref<98xf32, #tpu.memory_space<smem>>
    %100 = vector.broadcast %99 : f32 to vector<1x256xf32>
    %101 = arith.mulf %100, %47 : vector<1x256xf32>
    %102 = arith.addf %95, %101 : vector<1x256xf32>
    %c50 = arith.constant 50 : index
    %103 = memref.load %arg1[%c50] : memref<98xf32, #tpu.memory_space<smem>>
    %104 = vector.broadcast %103 : f32 to vector<1x256xf32>
    %105 = arith.mulf %104, %52 : vector<1x256xf32>
    %106 = arith.addf %98, %105 : vector<1x256xf32>
    %c2_41 = arith.constant 2 : index
    %107 = memref.load %arg1[%c2_41] : memref<98xf32, #tpu.memory_space<smem>>
    %108 = vector.broadcast %107 : f32 to vector<1x256xf32>
    %109 = arith.mulf %108, %57 : vector<1x256xf32>
    %110 = arith.addf %102, %109 : vector<1x256xf32>
    %c51 = arith.constant 51 : index
    %111 = memref.load %arg1[%c51] : memref<98xf32, #tpu.memory_space<smem>>
    %112 = vector.broadcast %111 : f32 to vector<1x256xf32>
    %113 = arith.mulf %112, %62 : vector<1x256xf32>
    %114 = arith.addf %106, %113 : vector<1x256xf32>
    %c3_42 = arith.constant 3 : index
    %115 = memref.load %arg1[%c3_42] : memref<98xf32, #tpu.memory_space<smem>>
    %116 = vector.broadcast %115 : f32 to vector<1x256xf32>
    %117 = arith.mulf %116, %15 : vector<1x256xf32>
    %118 = arith.addf %110, %117 : vector<1x256xf32>
    %c52 = arith.constant 52 : index
    %119 = memref.load %arg1[%c52] : memref<98xf32, #tpu.memory_space<smem>>
    %120 = vector.broadcast %119 : f32 to vector<1x256xf32>
    %121 = arith.mulf %120, %13 : vector<1x256xf32>
    %122 = arith.addf %114, %121 : vector<1x256xf32>
    %c4 = arith.constant 4 : index
    %123 = memref.load %arg1[%c4] : memref<98xf32, #tpu.memory_space<smem>>
    %124 = vector.broadcast %123 : f32 to vector<1x256xf32>
    %125 = arith.mulf %124, %67 : vector<1x256xf32>
    %126 = arith.addf %118, %125 : vector<1x256xf32>
    %c53 = arith.constant 53 : index
    %127 = memref.load %arg1[%c53] : memref<98xf32, #tpu.memory_space<smem>>
    %128 = vector.broadcast %127 : f32 to vector<1x256xf32>
    %129 = arith.mulf %128, %72 : vector<1x256xf32>
    %130 = arith.addf %122, %129 : vector<1x256xf32>
    %c5 = arith.constant 5 : index
    %131 = memref.load %arg1[%c5] : memref<98xf32, #tpu.memory_space<smem>>
    %132 = vector.broadcast %131 : f32 to vector<1x256xf32>
    %133 = arith.mulf %132, %77 : vector<1x256xf32>
    %134 = arith.addf %126, %133 : vector<1x256xf32>
    %c54 = arith.constant 54 : index
    %135 = memref.load %arg1[%c54] : memref<98xf32, #tpu.memory_space<smem>>
    %136 = vector.broadcast %135 : f32 to vector<1x256xf32>
    %137 = arith.mulf %136, %82 : vector<1x256xf32>
    %138 = arith.addf %130, %137 : vector<1x256xf32>
    %c6 = arith.constant 6 : index
    %139 = memref.load %arg1[%c6] : memref<98xf32, #tpu.memory_space<smem>>
    %140 = vector.broadcast %139 : f32 to vector<1x256xf32>
    %141 = arith.mulf %140, %87 : vector<1x256xf32>
    %142 = arith.addf %134, %141 : vector<1x256xf32>
    %c55 = arith.constant 55 : index
    %143 = memref.load %arg1[%c55] : memref<98xf32, #tpu.memory_space<smem>>
    %144 = vector.broadcast %143 : f32 to vector<1x256xf32>
    %145 = arith.mulf %144, %92 : vector<1x256xf32>
    %146 = arith.addf %138, %145 : vector<1x256xf32>
    %147 = arith.addf %142, %146 : vector<1x256xf32>
    %c48_i32 = arith.constant 48 : i32
    %148 = tpu.dynamic_rotate %147 by %c48_i32 dim 1 : vector<1x256xf32>, i32 -> vector<1x256xf32>
    %c48_i32_43 = arith.constant 48 : i32
    %149 = vector.broadcast %c48_i32_43 : i32 to vector<1x256xi32>
    %150 = arith.cmpi sge, %16, %149 : vector<1x256xi32>
    %cst_44 = arith.constant 0.000000e+00 : f32
    %151 = vector.broadcast %cst_44 : f32 to vector<1x256xf32>
    %152 = arith.select %150, %148, %151 : vector<1x256xi1>, vector<1x256xf32>
    %c7 = arith.constant 7 : index
    %153 = memref.load %arg1[%c7] : memref<98xf32, #tpu.memory_space<smem>>
    %154 = vector.broadcast %153 : f32 to vector<1x256xf32>
    %155 = arith.mulf %154, %37 : vector<1x256xf32>
    %c56 = arith.constant 56 : index
    %156 = memref.load %arg1[%c56] : memref<98xf32, #tpu.memory_space<smem>>
    %157 = vector.broadcast %156 : f32 to vector<1x256xf32>
    %158 = arith.mulf %157, %42 : vector<1x256xf32>
    %c8 = arith.constant 8 : index
    %159 = memref.load %arg1[%c8] : memref<98xf32, #tpu.memory_space<smem>>
    %160 = vector.broadcast %159 : f32 to vector<1x256xf32>
    %161 = arith.mulf %160, %47 : vector<1x256xf32>
    %162 = arith.addf %155, %161 : vector<1x256xf32>
    %c57 = arith.constant 57 : index
    %163 = memref.load %arg1[%c57] : memref<98xf32, #tpu.memory_space<smem>>
    %164 = vector.broadcast %163 : f32 to vector<1x256xf32>
    %165 = arith.mulf %164, %52 : vector<1x256xf32>
    %166 = arith.addf %158, %165 : vector<1x256xf32>
    %c9 = arith.constant 9 : index
    %167 = memref.load %arg1[%c9] : memref<98xf32, #tpu.memory_space<smem>>
    %168 = vector.broadcast %167 : f32 to vector<1x256xf32>
    %169 = arith.mulf %168, %57 : vector<1x256xf32>
    %170 = arith.addf %162, %169 : vector<1x256xf32>
    %c58 = arith.constant 58 : index
    %171 = memref.load %arg1[%c58] : memref<98xf32, #tpu.memory_space<smem>>
    %172 = vector.broadcast %171 : f32 to vector<1x256xf32>
    %173 = arith.mulf %172, %62 : vector<1x256xf32>
    %174 = arith.addf %166, %173 : vector<1x256xf32>
    %c10 = arith.constant 10 : index
    %175 = memref.load %arg1[%c10] : memref<98xf32, #tpu.memory_space<smem>>
    %176 = vector.broadcast %175 : f32 to vector<1x256xf32>
    %177 = arith.mulf %176, %15 : vector<1x256xf32>
    %178 = arith.addf %170, %177 : vector<1x256xf32>
    %c59 = arith.constant 59 : index
    %179 = memref.load %arg1[%c59] : memref<98xf32, #tpu.memory_space<smem>>
    %180 = vector.broadcast %179 : f32 to vector<1x256xf32>
    %181 = arith.mulf %180, %13 : vector<1x256xf32>
    %182 = arith.addf %174, %181 : vector<1x256xf32>
    %c11 = arith.constant 11 : index
    %183 = memref.load %arg1[%c11] : memref<98xf32, #tpu.memory_space<smem>>
    %184 = vector.broadcast %183 : f32 to vector<1x256xf32>
    %185 = arith.mulf %184, %67 : vector<1x256xf32>
    %186 = arith.addf %178, %185 : vector<1x256xf32>
    %c60 = arith.constant 60 : index
    %187 = memref.load %arg1[%c60] : memref<98xf32, #tpu.memory_space<smem>>
    %188 = vector.broadcast %187 : f32 to vector<1x256xf32>
    %189 = arith.mulf %188, %72 : vector<1x256xf32>
    %190 = arith.addf %182, %189 : vector<1x256xf32>
    %c12 = arith.constant 12 : index
    %191 = memref.load %arg1[%c12] : memref<98xf32, #tpu.memory_space<smem>>
    %192 = vector.broadcast %191 : f32 to vector<1x256xf32>
    %193 = arith.mulf %192, %77 : vector<1x256xf32>
    %194 = arith.addf %186, %193 : vector<1x256xf32>
    %c61 = arith.constant 61 : index
    %195 = memref.load %arg1[%c61] : memref<98xf32, #tpu.memory_space<smem>>
    %196 = vector.broadcast %195 : f32 to vector<1x256xf32>
    %197 = arith.mulf %196, %82 : vector<1x256xf32>
    %198 = arith.addf %190, %197 : vector<1x256xf32>
    %c13 = arith.constant 13 : index
    %199 = memref.load %arg1[%c13] : memref<98xf32, #tpu.memory_space<smem>>
    %200 = vector.broadcast %199 : f32 to vector<1x256xf32>
    %201 = arith.mulf %200, %87 : vector<1x256xf32>
    %202 = arith.addf %194, %201 : vector<1x256xf32>
    %c62 = arith.constant 62 : index
    %203 = memref.load %arg1[%c62] : memref<98xf32, #tpu.memory_space<smem>>
    %204 = vector.broadcast %203 : f32 to vector<1x256xf32>
    %205 = arith.mulf %204, %92 : vector<1x256xf32>
    %206 = arith.addf %198, %205 : vector<1x256xf32>
    %207 = arith.addf %202, %206 : vector<1x256xf32>
    %c32_i32 = arith.constant 32 : i32
    %208 = tpu.dynamic_rotate %207 by %c32_i32 dim 1 : vector<1x256xf32>, i32 -> vector<1x256xf32>
    %c32_i32_45 = arith.constant 32 : i32
    %209 = vector.broadcast %c32_i32_45 : i32 to vector<1x256xi32>
    %210 = arith.cmpi sge, %16, %209 : vector<1x256xi32>
    %cst_46 = arith.constant 0.000000e+00 : f32
    %211 = vector.broadcast %cst_46 : f32 to vector<1x256xf32>
    %212 = arith.select %210, %208, %211 : vector<1x256xi1>, vector<1x256xf32>
    %c14 = arith.constant 14 : index
    %213 = memref.load %arg1[%c14] : memref<98xf32, #tpu.memory_space<smem>>
    %214 = vector.broadcast %213 : f32 to vector<1x256xf32>
    %215 = arith.mulf %214, %37 : vector<1x256xf32>
    %c63 = arith.constant 63 : index
    %216 = memref.load %arg1[%c63] : memref<98xf32, #tpu.memory_space<smem>>
    %217 = vector.broadcast %216 : f32 to vector<1x256xf32>
    %218 = arith.mulf %217, %42 : vector<1x256xf32>
    %c15 = arith.constant 15 : index
    %219 = memref.load %arg1[%c15] : memref<98xf32, #tpu.memory_space<smem>>
    %220 = vector.broadcast %219 : f32 to vector<1x256xf32>
    %221 = arith.mulf %220, %47 : vector<1x256xf32>
    %222 = arith.addf %215, %221 : vector<1x256xf32>
    %c64 = arith.constant 64 : index
    %223 = memref.load %arg1[%c64] : memref<98xf32, #tpu.memory_space<smem>>
    %224 = vector.broadcast %223 : f32 to vector<1x256xf32>
    %225 = arith.mulf %224, %52 : vector<1x256xf32>
    %226 = arith.addf %218, %225 : vector<1x256xf32>
    %c16 = arith.constant 16 : index
    %227 = memref.load %arg1[%c16] : memref<98xf32, #tpu.memory_space<smem>>
    %228 = vector.broadcast %227 : f32 to vector<1x256xf32>
    %229 = arith.mulf %228, %57 : vector<1x256xf32>
    %230 = arith.addf %222, %229 : vector<1x256xf32>
    %c65 = arith.constant 65 : index
    %231 = memref.load %arg1[%c65] : memref<98xf32, #tpu.memory_space<smem>>
    %232 = vector.broadcast %231 : f32 to vector<1x256xf32>
    %233 = arith.mulf %232, %62 : vector<1x256xf32>
    %234 = arith.addf %226, %233 : vector<1x256xf32>
    %c17 = arith.constant 17 : index
    %235 = memref.load %arg1[%c17] : memref<98xf32, #tpu.memory_space<smem>>
    %236 = vector.broadcast %235 : f32 to vector<1x256xf32>
    %237 = arith.mulf %236, %15 : vector<1x256xf32>
    %238 = arith.addf %230, %237 : vector<1x256xf32>
    %c66 = arith.constant 66 : index
    %239 = memref.load %arg1[%c66] : memref<98xf32, #tpu.memory_space<smem>>
    %240 = vector.broadcast %239 : f32 to vector<1x256xf32>
    %241 = arith.mulf %240, %13 : vector<1x256xf32>
    %242 = arith.addf %234, %241 : vector<1x256xf32>
    %c18 = arith.constant 18 : index
    %243 = memref.load %arg1[%c18] : memref<98xf32, #tpu.memory_space<smem>>
    %244 = vector.broadcast %243 : f32 to vector<1x256xf32>
    %245 = arith.mulf %244, %67 : vector<1x256xf32>
    %246 = arith.addf %238, %245 : vector<1x256xf32>
    %c67 = arith.constant 67 : index
    %247 = memref.load %arg1[%c67] : memref<98xf32, #tpu.memory_space<smem>>
    %248 = vector.broadcast %247 : f32 to vector<1x256xf32>
    %249 = arith.mulf %248, %72 : vector<1x256xf32>
    %250 = arith.addf %242, %249 : vector<1x256xf32>
    %c19 = arith.constant 19 : index
    %251 = memref.load %arg1[%c19] : memref<98xf32, #tpu.memory_space<smem>>
    %252 = vector.broadcast %251 : f32 to vector<1x256xf32>
    %253 = arith.mulf %252, %77 : vector<1x256xf32>
    %254 = arith.addf %246, %253 : vector<1x256xf32>
    %c68 = arith.constant 68 : index
    %255 = memref.load %arg1[%c68] : memref<98xf32, #tpu.memory_space<smem>>
    %256 = vector.broadcast %255 : f32 to vector<1x256xf32>
    %257 = arith.mulf %256, %82 : vector<1x256xf32>
    %258 = arith.addf %250, %257 : vector<1x256xf32>
    %c20 = arith.constant 20 : index
    %259 = memref.load %arg1[%c20] : memref<98xf32, #tpu.memory_space<smem>>
    %260 = vector.broadcast %259 : f32 to vector<1x256xf32>
    %261 = arith.mulf %260, %87 : vector<1x256xf32>
    %262 = arith.addf %254, %261 : vector<1x256xf32>
    %c69 = arith.constant 69 : index
    %263 = memref.load %arg1[%c69] : memref<98xf32, #tpu.memory_space<smem>>
    %264 = vector.broadcast %263 : f32 to vector<1x256xf32>
    %265 = arith.mulf %264, %92 : vector<1x256xf32>
    %266 = arith.addf %258, %265 : vector<1x256xf32>
    %267 = arith.addf %262, %266 : vector<1x256xf32>
    %c16_i32_47 = arith.constant 16 : i32
    %268 = tpu.dynamic_rotate %267 by %c16_i32_47 dim 1 : vector<1x256xf32>, i32 -> vector<1x256xf32>
    %c16_i32_48 = arith.constant 16 : i32
    %269 = vector.broadcast %c16_i32_48 : i32 to vector<1x256xi32>
    %270 = arith.cmpi sge, %16, %269 : vector<1x256xi32>
    %cst_49 = arith.constant 0.000000e+00 : f32
    %271 = vector.broadcast %cst_49 : f32 to vector<1x256xf32>
    %272 = arith.select %270, %268, %271 : vector<1x256xi1>, vector<1x256xf32>
    %c21 = arith.constant 21 : index
    %273 = memref.load %arg1[%c21] : memref<98xf32, #tpu.memory_space<smem>>
    %274 = vector.broadcast %273 : f32 to vector<1x256xf32>
    %275 = arith.mulf %274, %37 : vector<1x256xf32>
    %c70 = arith.constant 70 : index
    %276 = memref.load %arg1[%c70] : memref<98xf32, #tpu.memory_space<smem>>
    %277 = vector.broadcast %276 : f32 to vector<1x256xf32>
    %278 = arith.mulf %277, %42 : vector<1x256xf32>
    %c22 = arith.constant 22 : index
    %279 = memref.load %arg1[%c22] : memref<98xf32, #tpu.memory_space<smem>>
    %280 = vector.broadcast %279 : f32 to vector<1x256xf32>
    %281 = arith.mulf %280, %47 : vector<1x256xf32>
    %282 = arith.addf %275, %281 : vector<1x256xf32>
    %c71 = arith.constant 71 : index
    %283 = memref.load %arg1[%c71] : memref<98xf32, #tpu.memory_space<smem>>
    %284 = vector.broadcast %283 : f32 to vector<1x256xf32>
    %285 = arith.mulf %284, %52 : vector<1x256xf32>
    %286 = arith.addf %278, %285 : vector<1x256xf32>
    %c23 = arith.constant 23 : index
    %287 = memref.load %arg1[%c23] : memref<98xf32, #tpu.memory_space<smem>>
    %288 = vector.broadcast %287 : f32 to vector<1x256xf32>
    %289 = arith.mulf %288, %57 : vector<1x256xf32>
    %290 = arith.addf %282, %289 : vector<1x256xf32>
    %c72 = arith.constant 72 : index
    %291 = memref.load %arg1[%c72] : memref<98xf32, #tpu.memory_space<smem>>
    %292 = vector.broadcast %291 : f32 to vector<1x256xf32>
    %293 = arith.mulf %292, %62 : vector<1x256xf32>
    %294 = arith.addf %286, %293 : vector<1x256xf32>
    %c24 = arith.constant 24 : index
    %295 = memref.load %arg1[%c24] : memref<98xf32, #tpu.memory_space<smem>>
    %296 = vector.broadcast %295 : f32 to vector<1x256xf32>
    %297 = arith.mulf %296, %15 : vector<1x256xf32>
    %298 = arith.addf %290, %297 : vector<1x256xf32>
    %c73 = arith.constant 73 : index
    %299 = memref.load %arg1[%c73] : memref<98xf32, #tpu.memory_space<smem>>
    %300 = vector.broadcast %299 : f32 to vector<1x256xf32>
    %301 = arith.mulf %300, %13 : vector<1x256xf32>
    %302 = arith.addf %294, %301 : vector<1x256xf32>
    %c25 = arith.constant 25 : index
    %303 = memref.load %arg1[%c25] : memref<98xf32, #tpu.memory_space<smem>>
    %304 = vector.broadcast %303 : f32 to vector<1x256xf32>
    %305 = arith.mulf %304, %67 : vector<1x256xf32>
    %306 = arith.addf %298, %305 : vector<1x256xf32>
    %c74 = arith.constant 74 : index
    %307 = memref.load %arg1[%c74] : memref<98xf32, #tpu.memory_space<smem>>
    %308 = vector.broadcast %307 : f32 to vector<1x256xf32>
    %309 = arith.mulf %308, %72 : vector<1x256xf32>
    %310 = arith.addf %302, %309 : vector<1x256xf32>
    %c26 = arith.constant 26 : index
    %311 = memref.load %arg1[%c26] : memref<98xf32, #tpu.memory_space<smem>>
    %312 = vector.broadcast %311 : f32 to vector<1x256xf32>
    %313 = arith.mulf %312, %77 : vector<1x256xf32>
    %314 = arith.addf %306, %313 : vector<1x256xf32>
    %c75 = arith.constant 75 : index
    %315 = memref.load %arg1[%c75] : memref<98xf32, #tpu.memory_space<smem>>
    %316 = vector.broadcast %315 : f32 to vector<1x256xf32>
    %317 = arith.mulf %316, %82 : vector<1x256xf32>
    %318 = arith.addf %310, %317 : vector<1x256xf32>
    %c27 = arith.constant 27 : index
    %319 = memref.load %arg1[%c27] : memref<98xf32, #tpu.memory_space<smem>>
    %320 = vector.broadcast %319 : f32 to vector<1x256xf32>
    %321 = arith.mulf %320, %87 : vector<1x256xf32>
    %322 = arith.addf %314, %321 : vector<1x256xf32>
    %c76 = arith.constant 76 : index
    %323 = memref.load %arg1[%c76] : memref<98xf32, #tpu.memory_space<smem>>
    %324 = vector.broadcast %323 : f32 to vector<1x256xf32>
    %325 = arith.mulf %324, %92 : vector<1x256xf32>
    %326 = arith.addf %318, %325 : vector<1x256xf32>
    %327 = arith.addf %322, %326 : vector<1x256xf32>
    %c28 = arith.constant 28 : index
    %328 = memref.load %arg1[%c28] : memref<98xf32, #tpu.memory_space<smem>>
    %329 = vector.broadcast %328 : f32 to vector<1x256xf32>
    %330 = arith.mulf %329, %37 : vector<1x256xf32>
    %c77 = arith.constant 77 : index
    %331 = memref.load %arg1[%c77] : memref<98xf32, #tpu.memory_space<smem>>
    %332 = vector.broadcast %331 : f32 to vector<1x256xf32>
    %333 = arith.mulf %332, %42 : vector<1x256xf32>
    %c29 = arith.constant 29 : index
    %334 = memref.load %arg1[%c29] : memref<98xf32, #tpu.memory_space<smem>>
    %335 = vector.broadcast %334 : f32 to vector<1x256xf32>
    %336 = arith.mulf %335, %47 : vector<1x256xf32>
    %337 = arith.addf %330, %336 : vector<1x256xf32>
    %c78 = arith.constant 78 : index
    %338 = memref.load %arg1[%c78] : memref<98xf32, #tpu.memory_space<smem>>
    %339 = vector.broadcast %338 : f32 to vector<1x256xf32>
    %340 = arith.mulf %339, %52 : vector<1x256xf32>
    %341 = arith.addf %333, %340 : vector<1x256xf32>
    %c30 = arith.constant 30 : index
    %342 = memref.load %arg1[%c30] : memref<98xf32, #tpu.memory_space<smem>>
    %343 = vector.broadcast %342 : f32 to vector<1x256xf32>
    %344 = arith.mulf %343, %57 : vector<1x256xf32>
    %345 = arith.addf %337, %344 : vector<1x256xf32>
    %c79 = arith.constant 79 : index
    %346 = memref.load %arg1[%c79] : memref<98xf32, #tpu.memory_space<smem>>
    %347 = vector.broadcast %346 : f32 to vector<1x256xf32>
    %348 = arith.mulf %347, %62 : vector<1x256xf32>
    %349 = arith.addf %341, %348 : vector<1x256xf32>
    %c31 = arith.constant 31 : index
    %350 = memref.load %arg1[%c31] : memref<98xf32, #tpu.memory_space<smem>>
    %351 = vector.broadcast %350 : f32 to vector<1x256xf32>
    %352 = arith.mulf %351, %15 : vector<1x256xf32>
    %353 = arith.addf %345, %352 : vector<1x256xf32>
    %c80 = arith.constant 80 : index
    %354 = memref.load %arg1[%c80] : memref<98xf32, #tpu.memory_space<smem>>
    %355 = vector.broadcast %354 : f32 to vector<1x256xf32>
    %356 = arith.mulf %355, %13 : vector<1x256xf32>
    %357 = arith.addf %349, %356 : vector<1x256xf32>
    %c32 = arith.constant 32 : index
    %358 = memref.load %arg1[%c32] : memref<98xf32, #tpu.memory_space<smem>>
    %359 = vector.broadcast %358 : f32 to vector<1x256xf32>
    %360 = arith.mulf %359, %67 : vector<1x256xf32>
    %361 = arith.addf %353, %360 : vector<1x256xf32>
    %c81 = arith.constant 81 : index
    %362 = memref.load %arg1[%c81] : memref<98xf32, #tpu.memory_space<smem>>
    %363 = vector.broadcast %362 : f32 to vector<1x256xf32>
    %364 = arith.mulf %363, %72 : vector<1x256xf32>
    %365 = arith.addf %357, %364 : vector<1x256xf32>
    %c33 = arith.constant 33 : index
    %366 = memref.load %arg1[%c33] : memref<98xf32, #tpu.memory_space<smem>>
    %367 = vector.broadcast %366 : f32 to vector<1x256xf32>
    %368 = arith.mulf %367, %77 : vector<1x256xf32>
    %369 = arith.addf %361, %368 : vector<1x256xf32>
    %c82 = arith.constant 82 : index
    %370 = memref.load %arg1[%c82] : memref<98xf32, #tpu.memory_space<smem>>
    %371 = vector.broadcast %370 : f32 to vector<1x256xf32>
    %372 = arith.mulf %371, %82 : vector<1x256xf32>
    %373 = arith.addf %365, %372 : vector<1x256xf32>
    %c34 = arith.constant 34 : index
    %374 = memref.load %arg1[%c34] : memref<98xf32, #tpu.memory_space<smem>>
    %375 = vector.broadcast %374 : f32 to vector<1x256xf32>
    %376 = arith.mulf %375, %87 : vector<1x256xf32>
    %377 = arith.addf %369, %376 : vector<1x256xf32>
    %c83 = arith.constant 83 : index
    %378 = memref.load %arg1[%c83] : memref<98xf32, #tpu.memory_space<smem>>
    %379 = vector.broadcast %378 : f32 to vector<1x256xf32>
    %380 = arith.mulf %379, %92 : vector<1x256xf32>
    %381 = arith.addf %373, %380 : vector<1x256xf32>
    %382 = arith.addf %377, %381 : vector<1x256xf32>
    %c240_i32 = arith.constant 240 : i32
    %383 = tpu.dynamic_rotate %382 by %c240_i32 dim 1 : vector<1x256xf32>, i32 -> vector<1x256xf32>
    %c240_i32_50 = arith.constant 240 : i32
    %384 = vector.broadcast %c240_i32_50 : i32 to vector<1x256xi32>
    %385 = arith.cmpi slt, %16, %384 : vector<1x256xi32>
    %cst_51 = arith.constant 0.000000e+00 : f32
    %386 = vector.broadcast %cst_51 : f32 to vector<1x256xf32>
    %387 = arith.select %385, %383, %386 : vector<1x256xi1>, vector<1x256xf32>
    %c35 = arith.constant 35 : index
    %388 = memref.load %arg1[%c35] : memref<98xf32, #tpu.memory_space<smem>>
    %389 = vector.broadcast %388 : f32 to vector<1x256xf32>
    %390 = arith.mulf %389, %37 : vector<1x256xf32>
    %c84 = arith.constant 84 : index
    %391 = memref.load %arg1[%c84] : memref<98xf32, #tpu.memory_space<smem>>
    %392 = vector.broadcast %391 : f32 to vector<1x256xf32>
    %393 = arith.mulf %392, %42 : vector<1x256xf32>
    %c36 = arith.constant 36 : index
    %394 = memref.load %arg1[%c36] : memref<98xf32, #tpu.memory_space<smem>>
    %395 = vector.broadcast %394 : f32 to vector<1x256xf32>
    %396 = arith.mulf %395, %47 : vector<1x256xf32>
    %397 = arith.addf %390, %396 : vector<1x256xf32>
    %c85 = arith.constant 85 : index
    %398 = memref.load %arg1[%c85] : memref<98xf32, #tpu.memory_space<smem>>
    %399 = vector.broadcast %398 : f32 to vector<1x256xf32>
    %400 = arith.mulf %399, %52 : vector<1x256xf32>
    %401 = arith.addf %393, %400 : vector<1x256xf32>
    %c37 = arith.constant 37 : index
    %402 = memref.load %arg1[%c37] : memref<98xf32, #tpu.memory_space<smem>>
    %403 = vector.broadcast %402 : f32 to vector<1x256xf32>
    %404 = arith.mulf %403, %57 : vector<1x256xf32>
    %405 = arith.addf %397, %404 : vector<1x256xf32>
    %c86 = arith.constant 86 : index
    %406 = memref.load %arg1[%c86] : memref<98xf32, #tpu.memory_space<smem>>
    %407 = vector.broadcast %406 : f32 to vector<1x256xf32>
    %408 = arith.mulf %407, %62 : vector<1x256xf32>
    %409 = arith.addf %401, %408 : vector<1x256xf32>
    %c38 = arith.constant 38 : index
    %410 = memref.load %arg1[%c38] : memref<98xf32, #tpu.memory_space<smem>>
    %411 = vector.broadcast %410 : f32 to vector<1x256xf32>
    %412 = arith.mulf %411, %15 : vector<1x256xf32>
    %413 = arith.addf %405, %412 : vector<1x256xf32>
    %c87 = arith.constant 87 : index
    %414 = memref.load %arg1[%c87] : memref<98xf32, #tpu.memory_space<smem>>
    %415 = vector.broadcast %414 : f32 to vector<1x256xf32>
    %416 = arith.mulf %415, %13 : vector<1x256xf32>
    %417 = arith.addf %409, %416 : vector<1x256xf32>
    %c39 = arith.constant 39 : index
    %418 = memref.load %arg1[%c39] : memref<98xf32, #tpu.memory_space<smem>>
    %419 = vector.broadcast %418 : f32 to vector<1x256xf32>
    %420 = arith.mulf %419, %67 : vector<1x256xf32>
    %421 = arith.addf %413, %420 : vector<1x256xf32>
    %c88 = arith.constant 88 : index
    %422 = memref.load %arg1[%c88] : memref<98xf32, #tpu.memory_space<smem>>
    %423 = vector.broadcast %422 : f32 to vector<1x256xf32>
    %424 = arith.mulf %423, %72 : vector<1x256xf32>
    %425 = arith.addf %417, %424 : vector<1x256xf32>
    %c40 = arith.constant 40 : index
    %426 = memref.load %arg1[%c40] : memref<98xf32, #tpu.memory_space<smem>>
    %427 = vector.broadcast %426 : f32 to vector<1x256xf32>
    %428 = arith.mulf %427, %77 : vector<1x256xf32>
    %429 = arith.addf %421, %428 : vector<1x256xf32>
    %c89 = arith.constant 89 : index
    %430 = memref.load %arg1[%c89] : memref<98xf32, #tpu.memory_space<smem>>
    %431 = vector.broadcast %430 : f32 to vector<1x256xf32>
    %432 = arith.mulf %431, %82 : vector<1x256xf32>
    %433 = arith.addf %425, %432 : vector<1x256xf32>
    %c41 = arith.constant 41 : index
    %434 = memref.load %arg1[%c41] : memref<98xf32, #tpu.memory_space<smem>>
    %435 = vector.broadcast %434 : f32 to vector<1x256xf32>
    %436 = arith.mulf %435, %87 : vector<1x256xf32>
    %437 = arith.addf %429, %436 : vector<1x256xf32>
    %c90 = arith.constant 90 : index
    %438 = memref.load %arg1[%c90] : memref<98xf32, #tpu.memory_space<smem>>
    %439 = vector.broadcast %438 : f32 to vector<1x256xf32>
    %440 = arith.mulf %439, %92 : vector<1x256xf32>
    %441 = arith.addf %433, %440 : vector<1x256xf32>
    %442 = arith.addf %437, %441 : vector<1x256xf32>
    %c224_i32 = arith.constant 224 : i32
    %443 = tpu.dynamic_rotate %442 by %c224_i32 dim 1 : vector<1x256xf32>, i32 -> vector<1x256xf32>
    %c224_i32_52 = arith.constant 224 : i32
    %444 = vector.broadcast %c224_i32_52 : i32 to vector<1x256xi32>
    %445 = arith.cmpi slt, %16, %444 : vector<1x256xi32>
    %cst_53 = arith.constant 0.000000e+00 : f32
    %446 = vector.broadcast %cst_53 : f32 to vector<1x256xf32>
    %447 = arith.select %445, %443, %446 : vector<1x256xi1>, vector<1x256xf32>
    %c42 = arith.constant 42 : index
    %448 = memref.load %arg1[%c42] : memref<98xf32, #tpu.memory_space<smem>>
    %449 = vector.broadcast %448 : f32 to vector<1x256xf32>
    %450 = arith.mulf %449, %37 : vector<1x256xf32>
    %c91 = arith.constant 91 : index
    %451 = memref.load %arg1[%c91] : memref<98xf32, #tpu.memory_space<smem>>
    %452 = vector.broadcast %451 : f32 to vector<1x256xf32>
    %453 = arith.mulf %452, %42 : vector<1x256xf32>
    %c43 = arith.constant 43 : index
    %454 = memref.load %arg1[%c43] : memref<98xf32, #tpu.memory_space<smem>>
    %455 = vector.broadcast %454 : f32 to vector<1x256xf32>
    %456 = arith.mulf %455, %47 : vector<1x256xf32>
    %457 = arith.addf %450, %456 : vector<1x256xf32>
    %c92 = arith.constant 92 : index
    %458 = memref.load %arg1[%c92] : memref<98xf32, #tpu.memory_space<smem>>
    %459 = vector.broadcast %458 : f32 to vector<1x256xf32>
    %460 = arith.mulf %459, %52 : vector<1x256xf32>
    %461 = arith.addf %453, %460 : vector<1x256xf32>
    %c44 = arith.constant 44 : index
    %462 = memref.load %arg1[%c44] : memref<98xf32, #tpu.memory_space<smem>>
    %463 = vector.broadcast %462 : f32 to vector<1x256xf32>
    %464 = arith.mulf %463, %57 : vector<1x256xf32>
    %465 = arith.addf %457, %464 : vector<1x256xf32>
    %c93 = arith.constant 93 : index
    %466 = memref.load %arg1[%c93] : memref<98xf32, #tpu.memory_space<smem>>
    %467 = vector.broadcast %466 : f32 to vector<1x256xf32>
    %468 = arith.mulf %467, %62 : vector<1x256xf32>
    %469 = arith.addf %461, %468 : vector<1x256xf32>
    %c45 = arith.constant 45 : index
    %470 = memref.load %arg1[%c45] : memref<98xf32, #tpu.memory_space<smem>>
    %471 = vector.broadcast %470 : f32 to vector<1x256xf32>
    %472 = arith.mulf %471, %15 : vector<1x256xf32>
    %473 = arith.addf %465, %472 : vector<1x256xf32>
    %c94 = arith.constant 94 : index
    %474 = memref.load %arg1[%c94] : memref<98xf32, #tpu.memory_space<smem>>
    %475 = vector.broadcast %474 : f32 to vector<1x256xf32>
    %476 = arith.mulf %475, %13 : vector<1x256xf32>
    %477 = arith.addf %469, %476 : vector<1x256xf32>
    %c46 = arith.constant 46 : index
    %478 = memref.load %arg1[%c46] : memref<98xf32, #tpu.memory_space<smem>>
    %479 = vector.broadcast %478 : f32 to vector<1x256xf32>
    %480 = arith.mulf %479, %67 : vector<1x256xf32>
    %481 = arith.addf %473, %480 : vector<1x256xf32>
    %c95 = arith.constant 95 : index
    %482 = memref.load %arg1[%c95] : memref<98xf32, #tpu.memory_space<smem>>
    %483 = vector.broadcast %482 : f32 to vector<1x256xf32>
    %484 = arith.mulf %483, %72 : vector<1x256xf32>
    %485 = arith.addf %477, %484 : vector<1x256xf32>
    %c47 = arith.constant 47 : index
    %486 = memref.load %arg1[%c47] : memref<98xf32, #tpu.memory_space<smem>>
    %487 = vector.broadcast %486 : f32 to vector<1x256xf32>
    %488 = arith.mulf %487, %77 : vector<1x256xf32>
    %489 = arith.addf %481, %488 : vector<1x256xf32>
    %c96 = arith.constant 96 : index
    %490 = memref.load %arg1[%c96] : memref<98xf32, #tpu.memory_space<smem>>
    %491 = vector.broadcast %490 : f32 to vector<1x256xf32>
    %492 = arith.mulf %491, %82 : vector<1x256xf32>
    %493 = arith.addf %485, %492 : vector<1x256xf32>
    %c48 = arith.constant 48 : index
    %494 = memref.load %arg1[%c48] : memref<98xf32, #tpu.memory_space<smem>>
    %495 = vector.broadcast %494 : f32 to vector<1x256xf32>
    %496 = arith.mulf %495, %87 : vector<1x256xf32>
    %497 = arith.addf %489, %496 : vector<1x256xf32>
    %c97 = arith.constant 97 : index
    %498 = memref.load %arg1[%c97] : memref<98xf32, #tpu.memory_space<smem>>
    %499 = vector.broadcast %498 : f32 to vector<1x256xf32>
    %500 = arith.mulf %499, %92 : vector<1x256xf32>
    %501 = arith.addf %493, %500 : vector<1x256xf32>
    %502 = arith.addf %497, %501 : vector<1x256xf32>
    %c208_i32 = arith.constant 208 : i32
    %503 = tpu.dynamic_rotate %502 by %c208_i32 dim 1 : vector<1x256xf32>, i32 -> vector<1x256xf32>
    %c208_i32_54 = arith.constant 208 : i32
    %504 = vector.broadcast %c208_i32_54 : i32 to vector<1x256xi32>
    %505 = arith.cmpi slt, %16, %504 : vector<1x256xi32>
    %cst_55 = arith.constant 0.000000e+00 : f32
    %506 = vector.broadcast %cst_55 : f32 to vector<1x256xf32>
    %507 = arith.select %505, %503, %506 : vector<1x256xi1>, vector<1x256xf32>
    %508 = arith.addf %152, %212 : vector<1x256xf32>
    %509 = arith.addf %272, %327 : vector<1x256xf32>
    %510 = arith.addf %387, %447 : vector<1x256xf32>
    %511 = arith.addf %508, %509 : vector<1x256xf32>
    %512 = arith.addf %510, %507 : vector<1x256xf32>
    %513 = arith.addf %511, %512 : vector<1x256xf32>
    %514 = arith.negf %513 : vector<1x256xf32>
    %515 = math.exp %514 : vector<1x256xf32>
    %cst_56 = arith.constant 1.000000e+00 : f32
    %516 = vector.broadcast %cst_56 : f32 to vector<1x256xf32>
    %517 = arith.addf %516, %515 : vector<1x256xf32>
    %518 = arith.divf %516, %517 : vector<1x256xf32>
    %c0_57 = arith.constant 0 : index
    %c0_58 = arith.constant 0 : index
    %c0_59 = arith.constant 0 : index
    %519 = vector.load %arg3[%c0_57, %c0_58, %c0_59] : memref<1x1x256xf32, #tpu.memory_space<vmem>>, vector<1x1x256xf32>
    %520 = vector.shape_cast %519 : vector<1x1x256xf32> to vector<1x256xf32>
    %521 = vector.shape_cast %518 : vector<1x256xf32> to vector<1x1x256xf32>
    tpu.vector_store %arg3[%c0_57, %c0_58, %c0_59], %521 {strides = array<i32>} : memref<1x1x256xf32, #tpu.memory_space<vmem>>, vector<1x1x256xf32>,
    return
  }
  func.func @transform_0(%arg0: i32) -> i32 {
    %c0_i32 = arith.constant 0 : i32
    %c0_i32_0 = arith.constant 0 : i32
    return %c0_i32 : i32
  }
  func.func @transform_1(%arg0: i32) -> (i32, i32, i32) {
    %c0_i32 = arith.constant 0 : i32
    %c0_i32_0 = arith.constant 0 : i32
    %c0_i32_1 = arith.constant 0 : i32
    return %arg0, %c0_i32, %c0_i32_0 : i32, i32, i32
  }
  func.func @transform_2(%arg0: i32) -> (i32, i32, i32) {
    %c0_i32 = arith.constant 0 : i32
    %c0_i32_0 = arith.constant 0 : i32
    %c0_i32_1 = arith.constant 0 : i32
    return %arg0, %c0_i32, %c0_i32_0 : i32, i32, i32
  }
}

</mosaic_0001>

<llo_original>
// kernel: tpu_custom_call.1
$region0: #{tpu_custom_call.1}
  #allocation0 [shape = 'u32[]', space=smem, size = 0x4, offset = 0x4, fixed_abs, tag = 'smem constant byte address 0x4 - core index']
  #allocation1 [shape = 'u32[144,128]{1,0:T(1,128)}', space=vmem, size = 0x12000, scoped, tag = 'internal scratch']
  %s0 = inlined_call_operand.hbm [shape: f32[98], index: 0, kind: input, shape index: {}]
  %s1 = inlined_call_operand.hbm [shape: f32[2,4,256], index: 1, kind: input, shape index: {}]
  %s2 = inlined_call_operand.hbm [shape: f32[2,1,256], index: 2, kind: output, shape index: {}]
  %s3 = sld [smem:[#allocation0]]
  $region49: #{tpu_custom_call.1} parent=0
    _
  %s5 = ssub.s32 1, %s3
  %s6 = scalar_select 0, %s5, %s3
  $region1: #{tpu_custom_call.1} parent=0
    #allocation2 [shape = 'u8[512]{0}', space=smem, size = 0x200, scoped, tag = 'input window, operand 0, single buffered']
    #allocation3 [shape = 's32[2]{0}', space=sflag, size = 0x8, scoped, tag = 'scoped memory for tpu_custom_call.1']
    #allocation4 [shape = 's32[2]{0}', space=sflag, size = 0x8, scoped, tag = 'scoped memory for tpu_custom_call.1']
    #allocation5 [shape = 's32[2]{0}', space=sflag, size = 0x8, scoped, tag = 'scoped memory for tpu_custom_call.1']
    #allocation6 [shape = 'u8[8192]{0}', space=vmem, size = 0x2000, scoped, tag = 'input window, operand 1']
    #allocation7 [shape = 'u8[2048]{0}', space=vmem, size = 0x800, scoped, tag = 'output window, operand 0']
    %7 = vsyncpa [#allocation5], 0
    %8 = vsyncpa [#allocation3], 0
    %s9 = scalar_lea.sflag [#allocation3], 1
    %10 = vsyncpa %s9, 0
    %11 = vsyncpa [#allocation4], 0
    %s12 = scalar_lea.sflag [#allocation4], 1
    %13 = vsyncpa %s12, 0
    loop: start=0, step=1, limit=4
    $region2: #{tpu_custom_call.1} parent=1 // loop_pre_header
      _
    $region3: #{tpu_custom_call.1} parent=1 // loop_header
      %s15 = sphi 0, %s19
      %p16 = scmp.ge.s32.totalorder %s15, 4
      %s23 = sphi 0, %s23
      %s25 = sphi 0, %s23
      %s26 = sphi 0, %s25
      %s40 = sphi 0, %s26
      %s46 = sphi 0, %s48
      %s49 = sphi 0, %s46
      %s50 = sphi 0, %s49
      %s66 = sphi 0, %s50
      %s72 = sphi 0, %s74
      %s75 = sphi 0, %s72
      %s76 = sphi 0, %s75
      %s92 = sphi 0, %s76
    $region4: #{tpu_custom_call.1} parent=1 // loop_header_branch
      %18 = sbr.rel (%p16) target = $region8
    $region5: #{tpu_custom_call.1} parent=1 // loop_body
      %s20 = ssub.s32 %s15, 1
      %s21 = ssub.s32 %s15, 2
      %s22 = sadd.s32 %s15, 1
      %s24 = sadd.s32 %s23, 1
      %p27 = scmp.eq.s32.totalorder %s15, 1
      %p28 = scmp.ne.s32.totalorder %s23, %s25
      %p29 = scmp.eq.s32.totalorder %s15, 0
      %p30 = por %p28, %p29
      %p31 = scmp.ne.s32.totalorder %s23, %s25
      %p32 = scmp.eq.s32.totalorder %s20, 1
      %p33 = por %p31, %p32
      %p34 = scmp.ne.s32.totalorder %s25, %s26
      %p35 = scmp.eq.s32.totalorder %s20, 0
      %p36 = por %p34, %p35
      %p37 = scmp.ne.s32.totalorder %s25, %s26
      %p38 = scmp.eq.s32.totalorder %s21, 1
      %p39 = por %p37, %p38
      %p41 = scmp.ne.s32.totalorder %s26, %s40
      %p42 = scmp.eq.s32.totalorder %s21, 0
      %p43 = por %p41, %p42
      %s44 = ssub.s32 %s15, %s22
      %p45 = scmp.eq.s32.totalorder %s44, 0
      %s47 = sadd.s32 %s46, 1
      %s48 = scalar_select %p45, %s46, %s47
      %p51 = pneg %p45
      %p52 = scmp.eq.s32.totalorder %s15, 1
      %p53 = por %p51, %p52
      %p54 = scmp.ne.s32.totalorder %s46, %s49
      %p55 = scmp.eq.s32.totalorder %s15, 0
      %p56 = por %p54, %p55
      %p57 = scmp.ne.s32.totalorder %s46, %s49
      %p58 = scmp.eq.s32.totalorder %s20, 1
      %p59 = por %p57, %p58
      %p60 = scmp.ne.s32.totalorder %s49, %s50
      %p61 = scmp.eq.s32.totalorder %s20, 0
      %p62 = por %p60, %p61
      %p63 = scmp.ne.s32.totalorder %s49, %s50
      %p64 = scmp.eq.s32.totalorder %s21, 1
      %p65 = por %p63, %p64
      %p67 = scmp.ne.s32.totalorder %s50, %s66
      %p68 = scmp.eq.s32.totalorder %s21, 0
      %p69 = por %p67, %p68
      %s70 = ssub.s32 %s15, %s22
      %p71 = scmp.eq.s32.totalorder %s70, 0
      %s73 = sadd.s32 %s72, 1
      %s74 = scalar_select %p71, %s72, %s73
      %p77 = pneg %p71
      %p78 = scmp.eq.s32.totalorder %s15, 1
      %p79 = por %p77, %p78
      %p80 = scmp.ne.s32.totalorder %s72, %s75
      %p81 = scmp.eq.s32.totalorder %s15, 0
      %p82 = por %p80, %p81
      %p83 = scmp.ne.s32.totalorder %s72, %s75
      %p84 = scmp.eq.s32.totalorder %s20, 1
      %p85 = por %p83, %p84
      %p86 = scmp.ne.s32.totalorder %s75, %s76
      %p87 = scmp.eq.s32.totalorder %s20, 0
      %p88 = por %p86, %p87
      %p89 = scmp.ne.s32.totalorder %s75, %s76
      %p90 = scmp.eq.s32.totalorder %s21, 1
      %p91 = por %p89, %p90
      %p93 = scmp.ne.s32.totalorder %s76, %s92
      %p94 = scmp.eq.s32.totalorder %s21, 0
      %p95 = por %p93, %p94
      %p96 = scmp.le.s32.totalorder 1, %s15
      %p97 = scmp.lt.s32.totalorder %s15, 3
      %p98 = pnand %p96, %p97
      %p99 = pneg %p98
      // Predicated region
      $region9: #{tpu_custom_call.1} parent=5 // pred_check
        _
      $region10: #{tpu_custom_call.1} parent=5 // pred_check_branch
        %101 = sbr.rel (%p98) target = $region12
      $region11: #{tpu_custom_call.1} parent=5 // pred_region
        %s102 = ssub.s32 %s15, 1
        // Predicated region
        $region13: #{tpu_custom_call.1} parent=11 // pred_check
          %p103 = pneg %p36
        $region14: #{tpu_custom_call.1} parent=11 // pred_check_branch
          %105 = sbr.rel (%p103) target = $region16
        $region15: #{tpu_custom_call.1} parent=11 // pred_region
          %s107 = ssub.s32 16, 16
          %108 = vsyncadd [#allocation5], %s107
          %111 = dma.hbm_to_smem %s0, 16, [#allocation2], [#allocation5]
        $region16: #{tpu_custom_call.1} parent=11 // pred_fallthru
          _
      $region12: #{tpu_custom_call.1} parent=5 // pred_fallthru
        _
      %p112 = scmp.lt.s32.totalorder %s15, 2
      // Predicated region
      $region17: #{tpu_custom_call.1} parent=5 // pred_check
        %p113 = pneg %p112
      $region18: #{tpu_custom_call.1} parent=5 // pred_check_branch
        %115 = sbr.rel (%p113) target = $region20
      $region19: #{tpu_custom_call.1} parent=5 // pred_region
        // Predicated region
        $region21: #{tpu_custom_call.1} parent=19 // pred_check
          %p116 = pneg %p56
        $region22: #{tpu_custom_call.1} parent=19 // pred_check_branch
          %118 = sbr.rel (%p116) target = $region24
        $region23: #{tpu_custom_call.1} parent=19 // pred_region
          %s119 = sand.u32 %s46, 1
          %s120 = scalar_lea.sflag [#allocation3], %s119
          %s121 = sand.u32 %s46, 1
          %s122 = smul.addr %s121, 8
          %s123 = scalar_lea.vmem [#allocation6], %s122
          %s125 = ssub.s32 128, 128
          %126 = vsyncadd %s120, %s125
          %s127 = smul.addr %s15, 2
          %s128 = smul.addr %s127, 64
          %s129 = scalar_lea.hbm %s1, %s128
          %s131 = sshll.u32 %s123, 4
          %s132 = int_to_ptr.vmem [resolvable:$true] %s131
          %134 = dma.hbm_to_vmem [thread:$0]  %s129, 128, %s132, %s120
        $region24: #{tpu_custom_call.1} parent=19 // pred_fallthru
          _
      $region20: #{tpu_custom_call.1} parent=5 // pred_fallthru
        _
      %p135 = scmp.le.s32.totalorder 1, %s15
      %p136 = scmp.lt.s32.totalorder %s15, 3
      %p137 = pnand %p135, %p136
      %p138 = pneg %p137
      // Predicated region
      $region25: #{tpu_custom_call.1} parent=5 // pred_check
        _
      $region26: #{tpu_custom_call.1} parent=5 // pred_check_branch
        %140 = sbr.rel (%p137) target = $region28
      $region27: #{tpu_custom_call.1} parent=5 // pred_region
        %s141 = ssub.s32 %s15, 1
        // Predicated region
        $region29: #{tpu_custom_call.1} parent=27 // pred_check
          %p142 = pneg %p36
        $region30: #{tpu_custom_call.1} parent=27 // pred_check_branch
          %144 = sbr.rel (%p142) target = $region32
        $region31: #{tpu_custom_call.1} parent=27 // pred_region
          %145 = dma.done [#allocation5], 16
        $region32: #{tpu_custom_call.1} parent=27 // pred_fallthru
          _
        %s146 = sand.u32 %s49, 1
        %s147 = scalar_lea.sflag [#allocation3], %s146
        %s148 = sand.u32 %s49, 1
        %s149 = smul.addr %s148, 8
        %s150 = scalar_lea.vmem [#allocation6], %s149
        // Predicated region
        $region33: #{tpu_custom_call.1} parent=27 // pred_check
          %p151 = pneg %p62
        $region34: #{tpu_custom_call.1} parent=27 // pred_check_branch
          %153 = sbr.rel (%p151) target = $region36
        $region35: #{tpu_custom_call.1} parent=27 // pred_region
          %154 = dma.done %s147, 128
        $region36: #{tpu_custom_call.1} parent=27 // pred_fallthru
          _
        %155 = sfence
        %p156 = pneg %p36
        %p157 = pneg %p33
        %s158 = sand.u32 %s49, 1
        %s159 = scalar_lea.sflag [#allocation3], %s158
        %s160 = sand.u32 %s49, 1
        %s161 = smul.addr %s160, 8
        %s162 = scalar_lea.vmem [#allocation6], %s161
        %p163 = pneg %p62
        %p164 = pneg %p59
        %p165 = pneg %p88
        %p166 = pneg %p85
        %s167 = sand.u32 %s75, 1
        %s168 = scalar_lea.sflag [#allocation4], %s167
        %s169 = sand.u32 %s75, 1
        %s170 = smul.addr %s169, 2
        %s171 = scalar_lea.vmem [#allocation7], %s170
        %v172 = vld [vmem:[%s150] ss:$4 sm:$0x3]
        %s173 = scalar_lea.vmem %s150, 1 [#allocation6]
        %v174 = vld [vmem:[%s173] ss:$4 sm:$0x3]
        %v175 = vadd.f32 %v172, %v174
        %v176 = vmax.f32 %v172, %v174
        %s177 = scalar_lea.vmem %s150, 2 [#allocation6]
        %v178 = vld [vmem:[%s177] ss:$4 sm:$0x3]
        %v179 = vadd.f32 %v175, %v178
        %v180 = vmax.f32 %v176, %v178
        %s181 = scalar_lea.vmem %s150, 3 [#allocation6]
        %v182 = vld [vmem:[%s181] ss:$4 sm:$0x3]
        %v183 = vadd.f32 %v179, %v182
        %v184 = vmax.f32 %v180, %v182
        %v185 = vmul.f32 %v183, 0.25
        %v186 = vlaneseq
        %v187 = vand.u32 %v186, 127
        %v188 = vadd.s32 %v187, 128
        %vm189 = vcmp.lt.s32.totalorder %v187, 0
        %v190 = vsub.s32 0, %v187
        %v191 = vsel %vm189, %v190, %v187
        %v192 = vshrl.u32 %v191, 4
        %v193 = vand.u32 %v191, 15
        %v194 = vsub.s32 0, %v193
        %v195 = vsel %vm189, %v194, %v193
        %vm196 = vcmp.lt.s32.totalorder %v188, 0
        %v197 = vsub.s32 0, %v188
        %v198 = vsel %vm196, %v197, %v188
        %v199 = vshrl.u32 %v198, 4
        %v200 = vand.u32 %v198, 15
        %v201 = vsub.s32 0, %v200
        %v202 = vsel %vm196, %v201, %v200
        %vm203 = vcmp.ne.s32.totalorder %v195, 0
        %vm204 = vcmp.ne.s32.totalorder %v202, 0
        %vm205 = vcmp.lt.s32.totalorder %v195, 0
        %vm206 = vcmp.lt.s32.totalorder %v202, 0
        %vm207 = vmand %vm205, %vm203
        %vm208 = vmand %vm206, %vm204
        %v209 = vadd.s32 %v195, 16
        %v210 = vadd.s32 %v202, 16
        %v211 = vsel %vm207, %v209, %v195
        %v212 = vsel %vm208, %v210, %v202
        %v214 = vlaneseq
        %v215 = vshrl.u32 %v214, 7
        %v216 = vsub.s32 0, %v215
        %v217 = vrot.slane %v185, %v216
        %v218 = vlaneseq
        %v219 = vshrl.u32 %v218, 7
        %v220 = vsub.s32 1, %v219
        %v221 = vrot.slane %v185, %v220
        %224 = vrot.lane.b32.xlu0 %v217, 3
        %v225 = vpop.permute.xlu0 %224
        %226 = vrot.lane.b32.xlu0 %v221, 3
        %v227 = vpop.permute.xlu0 %226
        %vm228 = vcmp.lt.s32.totalorder %v187, 3
        %v229 = vsel %vm228, %v225, %v227
        %v230 = vsel %vm228, %v227, %v225
        %vm231 = vcmp.ge.s32.totalorder %v211, 3
        %vm232 = vcmp.ge.s32.totalorder %v212, 3
        %v233 = vsel %vm231, %v230, 0.0
        %v234 = vsel %vm232, %v229, 0.0
        %v236 = vlaneseq
        %v237 = vshrl.u32 %v236, 7
        %v238 = vsub.s32 0, %v237
        %v239 = vrot.slane %v184, %v238
        %v240 = vlaneseq
        %v241 = vshrl.u32 %v240, 7
        %v242 = vsub.s32 1, %v241
        %v243 = vrot.slane %v184, %v242
        %246 = vrot.lane.b32.xlu0 %v239, 3
        %v247 = vpop.permute.xlu0 %246
        %248 = vrot.lane.b32.xlu0 %v243, 3
        %v249 = vpop.permute.xlu0 %248
        %v250 = vsel %vm228, %v247, %v249
        %v251 = vsel %vm228, %v249, %v247
        %v252 = vsel %vm231, %v251, 0.0
        %v253 = vsel %vm232, %v250, 0.0
        %254 = vrot.lane.b32.xlu0 %v217, 2
        %v255 = vpop.permute.xlu0 %254
        %256 = vrot.lane.b32.xlu0 %v221, 2
        %v257 = vpop.permute.xlu0 %256
        %vm258 = vcmp.lt.s32.totalorder %v187, 2
        %v259 = vsel %vm258, %v255, %v257
        %v260 = vsel %vm258, %v257, %v255
        %vm261 = vcmp.ge.s32.totalorder %v211, 2
        %vm262 = vcmp.ge.s32.totalorder %v212, 2
        %v263 = vsel %vm261, %v260, 0.0
        %v264 = vsel %vm262, %v259, 0.0
        %265 = vrot.lane.b32.xlu0 %v239, 2
        %v266 = vpop.permute.xlu0 %265
        %267 = vrot.lane.b32.xlu0 %v243, 2
        %v268 = vpop.permute.xlu0 %267
        %v269 = vsel %vm258, %v266, %v268
        %v270 = vsel %vm258, %v268, %v266
        %v271 = vsel %vm261, %v270, 0.0
        %v272 = vsel %vm262, %v269, 0.0
        %273 = vrot.lane.b32.xlu0 %v217, 1
        %v274 = vpop.permute.xlu0 %273
        %275 = vrot.lane.b32.xlu0 %v221, 1
        %v276 = vpop.permute.xlu0 %275
        %vm277 = vcmp.lt.s32.totalorder %v187, 1
        %v278 = vsel %vm277, %v274, %v276
        %v279 = vsel %vm277, %v276, %v274
        %vm280 = vcmp.ge.s32.totalorder %v211, 1
        %vm281 = vcmp.ge.s32.totalorder %v212, 1
        %v282 = vsel %vm280, %v279, 0.0
        %v283 = vsel %vm281, %v278, 0.0
        %284 = vrot.lane.b32.xlu0 %v239, 1
        %v285 = vpop.permute.xlu0 %284
        %286 = vrot.lane.b32.xlu0 %v243, 1
        %v287 = vpop.permute.xlu0 %286
        %v288 = vsel %vm277, %v285, %v287
        %v289 = vsel %vm277, %v287, %v285
        %v290 = vsel %vm280, %v289, 0.0
        %v291 = vsel %vm281, %v288, 0.0
        %292 = vrot.lane.b32.xlu0 %v217, 127
        %v293 = vpop.permute.xlu0 %292
        %294 = vrot.lane.b32.xlu0 %v221, 127
        %v295 = vpop.permute.xlu0 %294
        %vm296 = vcmp.lt.s32.totalorder %v187, 127
        %v297 = vsel %vm296, %v293, %v295
        %v298 = vsel %vm296, %v295, %v293
        %vm299 = vcmp.lt.s32.totalorder %v211, 15
        %vm300 = vcmp.lt.s32.totalorder %v212, 15
        %v301 = vsel %vm299, %v297, 0.0
        %v302 = vsel %vm300, %v298, 0.0
        %303 = vrot.lane.b32.xlu0 %v239, 127
        %v304 = vpop.permute.xlu0 %303
        %305 = vrot.lane.b32.xlu0 %v243, 127
        %v306 = vpop.permute.xlu0 %305
        %v307 = vsel %vm296, %v304, %v306
        %v308 = vsel %vm296, %v306, %v304
        %v309 = vsel %vm299, %v307, 0.0
        %v310 = vsel %vm300, %v308, 0.0
        %311 = vrot.lane.b32.xlu0 %v217, 126
        %v312 = vpop.permute.xlu0 %311
        %313 = vrot.lane.b32.xlu0 %v221, 126
        %v314 = vpop.permute.xlu0 %313
        %vm315 = vcmp.lt.s32.totalorder %v187, 126
        %v316 = vsel %vm315, %v312, %v314
        %v317 = vsel %vm315, %v314, %v312
        %vm318 = vcmp.lt.s32.totalorder %v211, 14
        %vm319 = vcmp.lt.s32.totalorder %v212, 14
        %v320 = vsel %vm318, %v316, 0.0
        %v321 = vsel %vm319, %v317, 0.0
        %322 = vrot.lane.b32.xlu0 %v239, 126
        %v323 = vpop.permute.xlu0 %322
        %324 = vrot.lane.b32.xlu0 %v243, 126
        %v325 = vpop.permute.xlu0 %324
        %v326 = vsel %vm315, %v323, %v325
        %v327 = vsel %vm315, %v325, %v323
        %v328 = vsel %vm318, %v326, 0.0
        %v329 = vsel %vm319, %v327, 0.0
        %330 = vrot.lane.b32.xlu0 %v217, 125
        %v331 = vpop.permute.xlu0 %330
        %332 = vrot.lane.b32.xlu0 %v221, 125
        %v333 = vpop.permute.xlu0 %332
        %vm334 = vcmp.lt.s32.totalorder %v187, 125
        %v335 = vsel %vm334, %v331, %v333
        %v336 = vsel %vm334, %v333, %v331
        %vm337 = vcmp.lt.s32.totalorder %v211, 13
        %vm338 = vcmp.lt.s32.totalorder %v212, 13
        %v339 = vsel %vm337, %v335, 0.0
        %v340 = vsel %vm338, %v336, 0.0
        %341 = vrot.lane.b32.xlu0 %v239, 125
        %v342 = vpop.permute.xlu0 %341
        %343 = vrot.lane.b32.xlu0 %v243, 125
        %v344 = vpop.permute.xlu0 %343
        %v345 = vsel %vm334, %v342, %v344
        %v346 = vsel %vm334, %v344, %v342
        %v347 = vsel %vm337, %v345, 0.0
        %v348 = vsel %vm338, %v346, 0.0
        %s349 = sld [smem:[#allocation2]]
        %v350 = vstv %s349
        %v351 = vmul.f32 %v350, %v233
        %v352 = vmul.f32 %v350, %v234
        %s353 = sld [smem:[#allocation2 + $0x31]]
        %v354 = vstv %s353
        %v355 = vmul.f32 %v354, %v252
        %v356 = vmul.f32 %v354, %v253
        %s357 = sld [smem:[#allocation2 + $0x1]]
        %v358 = vstv %s357
        %v359 = vmul.f32 %v358, %v263
        %v360 = vmul.f32 %v358, %v264
        %v361 = vadd.f32 %v351, %v359
        %v362 = vadd.f32 %v352, %v360
        %s363 = sld [smem:[#allocation2 + $0x32]]
        %v364 = vstv %s363
        %v365 = vmul.f32 %v364, %v271
        %v366 = vmul.f32 %v364, %v272
        %v367 = vadd.f32 %v355, %v365
        %v368 = vadd.f32 %v356, %v366
        %s369 = sld [smem:[#allocation2 + $0x2]]
        %v370 = vstv %s369
        %v371 = vmul.f32 %v370, %v282
        %v372 = vmul.f32 %v370, %v283
        %v373 = vadd.f32 %v361, %v371
        %v374 = vadd.f32 %v362, %v372
        %s375 = sld [smem:[#allocation2 + $0x33]]
        %v376 = vstv %s375
        %v377 = vmul.f32 %v376, %v290
        %v378 = vmul.f32 %v376, %v291
        %v379 = vadd.f32 %v367, %v377
        %v380 = vadd.f32 %v368, %v378
        %s381 = sld [smem:[#allocation2 + $0x3]]
        %v382 = vstv %s381
        %v383 = vmul.f32 %v382, %v185
        %v385 = vlaneseq
        %v386 = vshrl.u32 %v385, 7
        %v387 = vsub.s32 0, %v386
        %v388 = vrot.slane %v383, %v387
        %v389 = vlaneseq
        %v390 = vshrl.u32 %v389, 7
        %v391 = vsub.s32 1, %v390
        %v392 = vrot.slane %v383, %v391
        %v395 = vadd.f32 %v373, %v388
        %v396 = vadd.f32 %v374, %v392
        %s397 = sld [smem:[#allocation2 + $0x34]]
        %v398 = vstv %s397
        %v399 = vmul.f32 %v398, %v184
        %v401 = vlaneseq
        %v402 = vshrl.u32 %v401, 7
        %v403 = vsub.s32 0, %v402
        %v404 = vrot.slane %v399, %v403
        %v405 = vlaneseq
        %v406 = vshrl.u32 %v405, 7
        %v407 = vsub.s32 1, %v406
        %v408 = vrot.slane %v399, %v407
        %v411 = vadd.f32 %v379, %v404
        %v412 = vadd.f32 %v380, %v408
        %s413 = sld [smem:[#allocation2 + $0x4]]
        %v414 = vstv %s413
        %v415 = vmul.f32 %v414, %v301
        %v416 = vmul.f32 %v414, %v302
        %v417 = vadd.f32 %v395, %v415
        %v418 = vadd.f32 %v396, %v416
        %s419 = sld [smem:[#allocation2 + $0x35]]
        %v420 = vstv %s419
        %v421 = vmul.f32 %v420, %v309
        %v422 = vmul.f32 %v420, %v310
        %v423 = vadd.f32 %v411, %v421
        %v424 = vadd.f32 %v412, %v422
        %s425 = sld [smem:[#allocation2 + $0x5]]
        %v426 = vstv %s425
        %v427 = vmul.f32 %v426, %v320
        %v428 = vmul.f32 %v426, %v321
        %v429 = vadd.f32 %v417, %v427
        %v430 = vadd.f32 %v418, %v428
        %s431 = sld [smem:[#allocation2 + $0x36]]
        %v432 = vstv %s431
        %v433 = vmul.f32 %v432, %v328
        %v434 = vmul.f32 %v432, %v329
        %v435 = vadd.f32 %v423, %v433
        %v436 = vadd.f32 %v424, %v434
        %s437 = sld [smem:[#allocation2 + $0x6]]
        %v438 = vstv %s437
        %v439 = vmul.f32 %v438, %v339
        %v440 = vmul.f32 %v438, %v340
        %v441 = vadd.f32 %v429, %v439
        %v442 = vadd.f32 %v430, %v440
        %s443 = sld [smem:[#allocation2 + $0x37]]
        %v444 = vstv %s443
        %v445 = vmul.f32 %v444, %v347
        %v446 = vmul.f32 %v444, %v348
        %v447 = vadd.f32 %v435, %v445
        %v448 = vadd.f32 %v436, %v446
        %v449 = vadd.f32 %v441, %v447
        %v450 = vadd.f32 %v442, %v448
        %451 = vrot.lane.b32.xlu0 %v449, 48
        %v452 = vpop.permute.xlu0 %451
        %453 = vrot.lane.b32.xlu0 %v450, 48
        %v454 = vpop.permute.xlu0 %453
        %vm455 = vcmp.lt.s32.totalorder %v187, 48
        %v456 = vsel %vm455, %v452, %v454
        %v457 = vsel %vm455, %v454, %v452
        %vm458 = vcmp.ge.s32.totalorder %v187, 48
        %vm459 = vcmp.ge.s32.totalorder %v188, 48
        %v460 = vsel %vm458, %v457, 0.0
        %v461 = vsel %vm459, %v456, 0.0
        %s462 = sld [smem:[#allocation2 + $0x7]]
        %v463 = vstv %s462
        %v464 = vmul.f32 %v463, %v233
        %v465 = vmul.f32 %v463, %v234
        %s466 = sld [smem:[#allocation2 + $0x38]]
        %v467 = vstv %s466
        %v468 = vmul.f32 %v467, %v252
        %v469 = vmul.f32 %v467, %v253
        %s470 = sld [smem:[#allocation2 + $0x8]]
        %v471 = vstv %s470
        %v472 = vmul.f32 %v471, %v263
        %v473 = vmul.f32 %v471, %v264
        %v474 = vadd.f32 %v464, %v472
        %v475 = vadd.f32 %v465, %v473
        %s476 = sld [smem:[#allocation2 + $0x39]]
        %v477 = vstv %s476
        %v478 = vmul.f32 %v477, %v271
        %v479 = vmul.f32 %v477, %v272
        %v480 = vadd.f32 %v468, %v478
        %v481 = vadd.f32 %v469, %v479
        %s482 = sld [smem:[#allocation2 + $0x9]]
        %v483 = vstv %s482
        %v484 = vmul.f32 %v483, %v282
        %v485 = vmul.f32 %v483, %v283
        %v486 = vadd.f32 %v474, %v484
        %v487 = vadd.f32 %v475, %v485
        %s488 = sld [smem:[#allocation2 + $0x3a]]
        %v489 = vstv %s488
        %v490 = vmul.f32 %v489, %v290
        %v491 = vmul.f32 %v489, %v291
        %v492 = vadd.f32 %v480, %v490
        %v493 = vadd.f32 %v481, %v491
        %s494 = sld [smem:[#allocation2 + $0xa]]
        %v495 = vstv %s494
        %v496 = vmul.f32 %v495, %v185
        %v498 = vlaneseq
        %v499 = vshrl.u32 %v498, 7
        %v500 = vsub.s32 0, %v499
        %v501 = vrot.slane %v496, %v500
        %v502 = vlaneseq
        %v503 = vshrl.u32 %v502, 7
        %v504 = vsub.s32 1, %v503
        %v505 = vrot.slane %v496, %v504
        %v508 = vadd.f32 %v486, %v501
        %v509 = vadd.f32 %v487, %v505
        %s510 = sld [smem:[#allocation2 + $0x3b]]
        %v511 = vstv %s510
        %v512 = vmul.f32 %v511, %v184
        %v514 = vlaneseq
        %v515 = vshrl.u32 %v514, 7
        %v516 = vsub.s32 0, %v515
        %v517 = vrot.slane %v512, %v516
        %v518 = vlaneseq
        %v519 = vshrl.u32 %v518, 7
        %v520 = vsub.s32 1, %v519
        %v521 = vrot.slane %v512, %v520
        %v524 = vadd.f32 %v492, %v517
        %v525 = vadd.f32 %v493, %v521
        %s526 = sld [smem:[#allocation2 + $0xb]]
        %v527 = vstv %s526
        %v528 = vmul.f32 %v527, %v301
        %v529 = vmul.f32 %v527, %v302
        %v530 = vadd.f32 %v508, %v528
        %v531 = vadd.f32 %v509, %v529
        %s532 = sld [smem:[#allocation2 + $0x3c]]
        %v533 = vstv %s532
        %v534 = vmul.f32 %v533, %v309
        %v535 = vmul.f32 %v533, %v310
        %v536 = vadd.f32 %v524, %v534
        %v537 = vadd.f32 %v525, %v535
        %s538 = sld [smem:[#allocation2 + $0xc]]
        %v539 = vstv %s538
        %v540 = vmul.f32 %v539, %v320
        %v541 = vmul.f32 %v539, %v321
        %v542 = vadd.f32 %v530, %v540
        %v543 = vadd.f32 %v531, %v541
        %s544 = sld [smem:[#allocation2 + $0x3d]]
        %v545 = vstv %s544
        %v546 = vmul.f32 %v545, %v328
        %v547 = vmul.f32 %v545, %v329
        %v548 = vadd.f32 %v536, %v546
        %v549 = vadd.f32 %v537, %v547
        %s550 = sld [smem:[#allocation2 + $0xd]]
        %v551 = vstv %s550
        %v552 = vmul.f32 %v551, %v339
        %v553 = vmul.f32 %v551, %v340
        %v554 = vadd.f32 %v542, %v552
        %v555 = vadd.f32 %v543, %v553
        %s556 = sld [smem:[#allocation2 + $0x3e]]
        %v557 = vstv %s556
        %v558 = vmul.f32 %v557, %v347
        %v559 = vmul.f32 %v557, %v348
        %v560 = vadd.f32 %v548, %v558
        %v561 = vadd.f32 %v549, %v559
        %v562 = vadd.f32 %v554, %v560
        %v563 = vadd.f32 %v555, %v561
        %564 = vrot.lane.b32.xlu0 %v562, 32
        %v565 = vpop.permute.xlu0 %564
        %566 = vrot.lane.b32.xlu0 %v563, 32
        %v567 = vpop.permute.xlu0 %566
        %vm568 = vcmp.lt.s32.totalorder %v187, 32
        %v569 = vsel %vm568, %v565, %v567
        %v570 = vsel %vm568, %v567, %v565
        %vm571 = vcmp.ge.s32.totalorder %v187, 32
        %vm572 = vcmp.ge.s32.totalorder %v188, 32
        %v573 = vsel %vm571, %v570, 0.0
        %v574 = vsel %vm572, %v569, 0.0
        %s575 = sld [smem:[#allocation2 + $0xe]]
        %v576 = vstv %s575
        %v577 = vmul.f32 %v576, %v233
        %v578 = vmul.f32 %v576, %v234
        %s579 = sld [smem:[#allocation2 + $0x3f]]
        %v580 = vstv %s579
        %v581 = vmul.f32 %v580, %v252
        %v582 = vmul.f32 %v580, %v253
        %s583 = sld [smem:[#allocation2 + $0xf]]
        %v584 = vstv %s583
        %v585 = vmul.f32 %v584, %v263
        %v586 = vmul.f32 %v584, %v264
        %v587 = vadd.f32 %v577, %v585
        %v588 = vadd.f32 %v578, %v586
        %s589 = sld [smem:[#allocation2 + $0x40]]
        %v590 = vstv %s589
        %v591 = vmul.f32 %v590, %v271
        %v592 = vmul.f32 %v590, %v272
        %v593 = vadd.f32 %v581, %v591
        %v594 = vadd.f32 %v582, %v592
        %s595 = sld [smem:[#allocation2 + $0x10]]
        %v596 = vstv %s595
        %v597 = vmul.f32 %v596, %v282
        %v598 = vmul.f32 %v596, %v283
        %v599 = vadd.f32 %v587, %v597
        %v600 = vadd.f32 %v588, %v598
        %s601 = sld [smem:[#allocation2 + $0x41]]
        %v602 = vstv %s601
        %v603 = vmul.f32 %v602, %v290
        %v604 = vmul.f32 %v602, %v291
        %v605 = vadd.f32 %v593, %v603
        %v606 = vadd.f32 %v594, %v604
        %s607 = sld [smem:[#allocation2 + $0x11]]
        %v608 = vstv %s607
        %v609 = vmul.f32 %v608, %v185
        %v611 = vlaneseq
        %v612 = vshrl.u32 %v611, 7
        %v613 = vsub.s32 0, %v612
        %v614 = vrot.slane %v609, %v613
        %v615 = vlaneseq
        %v616 = vshrl.u32 %v615, 7
        %v617 = vsub.s32 1, %v616
        %v618 = vrot.slane %v609, %v617
        %v621 = vadd.f32 %v599, %v614
        %v622 = vadd.f32 %v600, %v618
        %s623 = sld [smem:[#allocation2 + $0x42]]
        %v624 = vstv %s623
        %v625 = vmul.f32 %v624, %v184
        %v627 = vlaneseq
        %v628 = vshrl.u32 %v627, 7
        %v629 = vsub.s32 0, %v628
        %v630 = vrot.slane %v625, %v629
        %v631 = vlaneseq
        %v632 = vshrl.u32 %v631, 7
        %v633 = vsub.s32 1, %v632
        %v634 = vrot.slane %v625, %v633
        %v637 = vadd.f32 %v605, %v630
        %v638 = vadd.f32 %v606, %v634
        %s639 = sld [smem:[#allocation2 + $0x12]]
        %v640 = vstv %s639
        %v641 = vmul.f32 %v640, %v301
        %v642 = vmul.f32 %v640, %v302
        %v643 = vadd.f32 %v621, %v641
        %v644 = vadd.f32 %v622, %v642
        %s645 = sld [smem:[#allocation2 + $0x43]]
        %v646 = vstv %s645
        %v647 = vmul.f32 %v646, %v309
        %v648 = vmul.f32 %v646, %v310
        %v649 = vadd.f32 %v637, %v647
        %v650 = vadd.f32 %v638, %v648
        %s651 = sld [smem:[#allocation2 + $0x13]]
        %v652 = vstv %s651
        %v653 = vmul.f32 %v652, %v320
        %v654 = vmul.f32 %v652, %v321
        %v655 = vadd.f32 %v643, %v653
        %v656 = vadd.f32 %v644, %v654
        %s657 = sld [smem:[#allocation2 + $0x44]]
        %v658 = vstv %s657
        %v659 = vmul.f32 %v658, %v328
        %v660 = vmul.f32 %v658, %v329
        %v661 = vadd.f32 %v649, %v659
        %v662 = vadd.f32 %v650, %v660
        %s663 = sld [smem:[#allocation2 + $0x14]]
        %v664 = vstv %s663
        %v665 = vmul.f32 %v664, %v339
        %v666 = vmul.f32 %v664, %v340
        %v667 = vadd.f32 %v655, %v665
        %v668 = vadd.f32 %v656, %v666
        %s669 = sld [smem:[#allocation2 + $0x45]]
        %v670 = vstv %s669
        %v671 = vmul.f32 %v670, %v347
        %v672 = vmul.f32 %v670, %v348
        %v673 = vadd.f32 %v661, %v671
        %v674 = vadd.f32 %v662, %v672
        %v675 = vadd.f32 %v667, %v673
        %v676 = vadd.f32 %v668, %v674
        %677 = vrot.lane.b32.xlu0 %v675, 16
        %v678 = vpop.permute.xlu0 %677
        %679 = vrot.lane.b32.xlu0 %v676, 16
        %v680 = vpop.permute.xlu0 %679
        %vm681 = vcmp.lt.s32.totalorder %v187, 16
        %v682 = vsel %vm681, %v678, %v680
        %v683 = vsel %vm681, %v680, %v678
        %vm684 = vcmp.ge.s32.totalorder %v187, 16
        %vm685 = vcmp.ge.s32.totalorder %v188, 16
        %v686 = vsel %vm684, %v683, 0.0
        %v687 = vsel %vm685, %v682, 0.0
        %s688 = sld [smem:[#allocation2 + $0x15]]
        %v689 = vstv %s688
        %v690 = vmul.f32 %v689, %v233
        %v691 = vmul.f32 %v689, %v234
        %s692 = sld [smem:[#allocation2 + $0x46]]
        %v693 = vstv %s692
        %v694 = vmul.f32 %v693, %v252
        %v695 = vmul.f32 %v693, %v253
        %s696 = sld [smem:[#allocation2 + $0x16]]
        %v697 = vstv %s696
        %v698 = vmul.f32 %v697, %v263
        %v699 = vmul.f32 %v697, %v264
        %v700 = vadd.f32 %v690, %v698
        %v701 = vadd.f32 %v691, %v699
        %s702 = sld [smem:[#allocation2 + $0x47]]
        %v703 = vstv %s702
        %v704 = vmul.f32 %v703, %v271
        %v705 = vmul.f32 %v703, %v272
        %v706 = vadd.f32 %v694, %v704
        %v707 = vadd.f32 %v695, %v705
        %s708 = sld [smem:[#allocation2 + $0x17]]
        %v709 = vstv %s708
        %v710 = vmul.f32 %v709, %v282
        %v711 = vmul.f32 %v709, %v283
        %v712 = vadd.f32 %v700, %v710
        %v713 = vadd.f32 %v701, %v711
        %s714 = sld [smem:[#allocation2 + $0x48]]
        %v715 = vstv %s714
        %v716 = vmul.f32 %v715, %v290
        %v717 = vmul.f32 %v715, %v291
        %v718 = vadd.f32 %v706, %v716
        %v719 = vadd.f32 %v707, %v717
        %s720 = sld [smem:[#allocation2 + $0x18]]
        %v721 = vstv %s720
        %v722 = vmul.f32 %v721, %v185
        %v724 = vlaneseq
        %v725 = vshrl.u32 %v724, 7
        %v726 = vsub.s32 0, %v725
        %v727 = vrot.slane %v722, %v726
        %v728 = vlaneseq
        %v729 = vshrl.u32 %v728, 7
        %v730 = vsub.s32 1, %v729
        %v731 = vrot.slane %v722, %v730
        %v734 = vadd.f32 %v712, %v727
        %v735 = vadd.f32 %v713, %v731
        %s736 = sld [smem:[#allocation2 + $0x49]]
        %v737 = vstv %s736
        %v738 = vmul.f32 %v737, %v184
        %v740 = vlaneseq
        %v741 = vshrl.u32 %v740, 7
        %v742 = vsub.s32 0, %v741
        %v743 = vrot.slane %v738, %v742
        %v744 = vlaneseq
        %v745 = vshrl.u32 %v744, 7
        %v746 = vsub.s32 1, %v745
        %v747 = vrot.slane %v738, %v746
        %v750 = vadd.f32 %v718, %v743
        %v751 = vadd.f32 %v719, %v747
        %s752 = sld [smem:[#allocation2 + $0x19]]
        %v753 = vstv %s752
        %v754 = vmul.f32 %v753, %v301
        %v755 = vmul.f32 %v753, %v302
        %v756 = vadd.f32 %v734, %v754
        %v757 = vadd.f32 %v735, %v755
        %s758 = sld [smem:[#allocation2 + $0x4a]]
        %v759 = vstv %s758
        %v760 = vmul.f32 %v759, %v309
        %v761 = vmul.f32 %v759, %v310
        %v762 = vadd.f32 %v750, %v760
        %v763 = vadd.f32 %v751, %v761
        %s764 = sld [smem:[#allocation2 + $0x1a]]
        %v765 = vstv %s764
        %v766 = vmul.f32 %v765, %v320
        %v767 = vmul.f32 %v765, %v321
        %v768 = vadd.f32 %v756, %v766
        %v769 = vadd.f32 %v757, %v767
        %s770 = sld [smem:[#allocation2 + $0x4b]]
        %v771 = vstv %s770
        %v772 = vmul.f32 %v771, %v328
        %v773 = vmul.f32 %v771, %v329
        %v774 = vadd.f32 %v762, %v772
        %v775 = vadd.f32 %v763, %v773
        %s776 = sld [smem:[#allocation2 + $0x1b]]
        %v777 = vstv %s776
        %v778 = vmul.f32 %v777, %v339
        %v779 = vmul.f32 %v777, %v340
        %v780 = vadd.f32 %v768, %v778
        %v781 = vadd.f32 %v769, %v779
        %s782 = sld [smem:[#allocation2 + $0x4c]]
        %v783 = vstv %s782
        %v784 = vmul.f32 %v783, %v347
        %v785 = vmul.f32 %v783, %v348
        %v786 = vadd.f32 %v774, %v784
        %v787 = vadd.f32 %v775, %v785
        %v788 = vadd.f32 %v780, %v786
        %v789 = vadd.f32 %v781, %v787
        %s790 = sld [smem:[#allocation2 + $0x1c]]
        %v791 = vstv %s790
        %v792 = vmul.f32 %v791, %v233
        %v793 = vmul.f32 %v791, %v234
        %s794 = sld [smem:[#allocation2 + $0x4d]]
        %v795 = vstv %s794
        %v796 = vmul.f32 %v795, %v252
        %v797 = vmul.f32 %v795, %v253
        %s798 = sld [smem:[#allocation2 + $0x1d]]
        %v799 = vstv %s798
        %v800 = vmul.f32 %v799, %v263
        %v801 = vmul.f32 %v799, %v264
        %v802 = vadd.f32 %v792, %v800
        %v803 = vadd.f32 %v793, %v801
        %s804 = sld [smem:[#allocation2 + $0x4e]]
        %v805 = vstv %s804
        %v806 = vmul.f32 %v805, %v271
        %v807 = vmul.f32 %v805, %v272
        %v808 = vadd.f32 %v796, %v806
        %v809 = vadd.f32 %v797, %v807
        %s810 = sld [smem:[#allocation2 + $0x1e]]
        %v811 = vstv %s810
        %v812 = vmul.f32 %v811, %v282
        %v813 = vmul.f32 %v811, %v283
        %v814 = vadd.f32 %v802, %v812
        %v815 = vadd.f32 %v803, %v813
        %s816 = sld [smem:[#allocation2 + $0x4f]]
        %v817 = vstv %s816
        %v818 = vmul.f32 %v817, %v290
        %v819 = vmul.f32 %v817, %v291
        %v820 = vadd.f32 %v808, %v818
        %v821 = vadd.f32 %v809, %v819
        %s822 = sld [smem:[#allocation2 + $0x1f]]
        %v823 = vstv %s822
        %v824 = vmul.f32 %v823, %v185
        %v826 = vlaneseq
        %v827 = vshrl.u32 %v826, 7
        %v828 = vsub.s32 0, %v827
        %v829 = vrot.slane %v824, %v828
        %v830 = vlaneseq
        %v831 = vshrl.u32 %v830, 7
        %v832 = vsub.s32 1, %v831
        %v833 = vrot.slane %v824, %v832
        %v836 = vadd.f32 %v814, %v829
        %v837 = vadd.f32 %v815, %v833
        %s838 = sld [smem:[#allocation2 + $0x50]]
        %v839 = vstv %s838
        %v840 = vmul.f32 %v839, %v184
        %v842 = vlaneseq
        %v843 = vshrl.u32 %v842, 7
        %v844 = vsub.s32 0, %v843
        %v845 = vrot.slane %v840, %v844
        %v846 = vlaneseq
        %v847 = vshrl.u32 %v846, 7
        %v848 = vsub.s32 1, %v847
        %v849 = vrot.slane %v840, %v848
        %v852 = vadd.f32 %v820, %v845
        %v853 = vadd.f32 %v821, %v849
        %s854 = sld [smem:[#allocation2 + $0x20]]
        %v855 = vstv %s854
        %v856 = vmul.f32 %v855, %v301
        %v857 = vmul.f32 %v855, %v302
        %v858 = vadd.f32 %v836, %v856
        %v859 = vadd.f32 %v837, %v857
        %s860 = sld [smem:[#allocation2 + $0x51]]
        %v861 = vstv %s860
        %v862 = vmul.f32 %v861, %v309
        %v863 = vmul.f32 %v861, %v310
        %v864 = vadd.f32 %v852, %v862
        %v865 = vadd.f32 %v853, %v863
        %s866 = sld [smem:[#allocation2 + $0x21]]
        %v867 = vstv %s866
        %v868 = vmul.f32 %v867, %v320
        %v869 = vmul.f32 %v867, %v321
        %v870 = vadd.f32 %v858, %v868
        %v871 = vadd.f32 %v859, %v869
        %s872 = sld [smem:[#allocation2 + $0x52]]
        %v873 = vstv %s872
        %v874 = vmul.f32 %v873, %v328
        %v875 = vmul.f32 %v873, %v329
        %v876 = vadd.f32 %v864, %v874
        %v877 = vadd.f32 %v865, %v875
        %s878 = sld [smem:[#allocation2 + $0x22]]
        %v879 = vstv %s878
        %v880 = vmul.f32 %v879, %v339
        %v881 = vmul.f32 %v879, %v340
        %v882 = vadd.f32 %v870, %v880
        %v883 = vadd.f32 %v871, %v881
        %s884 = sld [smem:[#allocation2 + $0x53]]
        %v885 = vstv %s884
        %v886 = vmul.f32 %v885, %v347
        %v887 = vmul.f32 %v885, %v348
        %v888 = vadd.f32 %v876, %v886
        %v889 = vadd.f32 %v877, %v887
        %v890 = vadd.f32 %v882, %v888
        %v891 = vadd.f32 %v883, %v889
        %892 = vrot.lane.b32.xlu0 %v890, 112
        %v893 = vpop.permute.xlu0 %892
        %894 = vrot.lane.b32.xlu0 %v891, 112
        %v895 = vpop.permute.xlu0 %894
        %vm896 = vcmp.lt.s32.totalorder %v187, 112
        %v897 = vsel %vm896, %v893, %v895
        %v898 = vsel %vm896, %v895, %v893
        %vm899 = vcmp.lt.s32.totalorder %v187, 240
        %vm900 = vcmp.lt.s32.totalorder %v188, 240
        %v901 = vsel %vm899, %v897, 0.0
        %v902 = vsel %vm900, %v898, 0.0
        %s903 = sld [smem:[#allocation2 + $0x23]]
        %v904 = vstv %s903
        %v905 = vmul.f32 %v904, %v233
        %v906 = vmul.f32 %v904, %v234
        %s907 = sld [smem:[#allocation2 + $0x54]]
        %v908 = vstv %s907
        %v909 = vmul.f32 %v908, %v252
        %v910 = vmul.f32 %v908, %v253
        %s911 = sld [smem:[#allocation2 + $0x24]]
        %v912 = vstv %s911
        %v913 = vmul.f32 %v912, %v263
        %v914 = vmul.f32 %v912, %v264
        %v915 = vadd.f32 %v905, %v913
        %v916 = vadd.f32 %v906, %v914
        %s917 = sld [smem:[#allocation2 + $0x55]]
        %v918 = vstv %s917
        %v919 = vmul.f32 %v918, %v271
        %v920 = vmul.f32 %v918, %v272
        %v921 = vadd.f32 %v909, %v919
        %v922 = vadd.f32 %v910, %v920
        %s923 = sld [smem:[#allocation2 + $0x25]]
        %v924 = vstv %s923
        %v925 = vmul.f32 %v924, %v282
        %v926 = vmul.f32 %v924, %v283
        %v927 = vadd.f32 %v915, %v925
        %v928 = vadd.f32 %v916, %v926
        %s929 = sld [smem:[#allocation2 + $0x56]]
        %v930 = vstv %s929
        %v931 = vmul.f32 %v930, %v290
        %v932 = vmul.f32 %v930, %v291
        %v933 = vadd.f32 %v921, %v931
        %v934 = vadd.f32 %v922, %v932
        %s935 = sld [smem:[#allocation2 + $0x26]]
        %v936 = vstv %s935
        %v937 = vmul.f32 %v936, %v185
        %v939 = vlaneseq
        %v940 = vshrl.u32 %v939, 7
        %v941 = vsub.s32 0, %v940
        %v942 = vrot.slane %v937, %v941
        %v943 = vlaneseq
        %v944 = vshrl.u32 %v943, 7
        %v945 = vsub.s32 1, %v944
        %v946 = vrot.slane %v937, %v945
        %v949 = vadd.f32 %v927, %v942
        %v950 = vadd.f32 %v928, %v946
        %s951 = sld [smem:[#allocation2 + $0x57]]
        %v952 = vstv %s951
        %v953 = vmul.f32 %v952, %v184
        %v955 = vlaneseq
        %v956 = vshrl.u32 %v955, 7
        %v957 = vsub.s32 0, %v956
        %v958 = vrot.slane %v953, %v957
        %v959 = vlaneseq
        %v960 = vshrl.u32 %v959, 7
        %v961 = vsub.s32 1, %v960
        %v962 = vrot.slane %v953, %v961
        %v965 = vadd.f32 %v933, %v958
        %v966 = vadd.f32 %v934, %v962
        %s967 = sld [smem:[#allocation2 + $0x27]]
        %v968 = vstv %s967
        %v969 = vmul.f32 %v968, %v301
        %v970 = vmul.f32 %v968, %v302
        %v971 = vadd.f32 %v949, %v969
        %v972 = vadd.f32 %v950, %v970
        %s973 = sld [smem:[#allocation2 + $0x58]]
        %v974 = vstv %s973
        %v975 = vmul.f32 %v974, %v309
        %v976 = vmul.f32 %v974, %v310
        %v977 = vadd.f32 %v965, %v975
        %v978 = vadd.f32 %v966, %v976
        %s979 = sld [smem:[#allocation2 + $0x28]]
        %v980 = vstv %s979
        %v981 = vmul.f32 %v980, %v320
        %v982 = vmul.f32 %v980, %v321
        %v983 = vadd.f32 %v971, %v981
        %v984 = vadd.f32 %v972, %v982
        %s985 = sld [smem:[#allocation2 + $0x59]]
        %v986 = vstv %s985
        %v987 = vmul.f32 %v986, %v328
        %v988 = vmul.f32 %v986, %v329
        %v989 = vadd.f32 %v977, %v987
        %v990 = vadd.f32 %v978, %v988
        %s991 = sld [smem:[#allocation2 + $0x29]]
        %v992 = vstv %s991
        %v993 = vmul.f32 %v992, %v339
        %v994 = vmul.f32 %v992, %v340
        %v995 = vadd.f32 %v983, %v993
        %v996 = vadd.f32 %v984, %v994
        %s997 = sld [smem:[#allocation2 + $0x5a]]
        %v998 = vstv %s997
        %v999 = vmul.f32 %v998, %v347
        %v1000 = vmul.f32 %v998, %v348
        %v1001 = vadd.f32 %v989, %v999
        %v1002 = vadd.f32 %v990, %v1000
        %v1003 = vadd.f32 %v995, %v1001
        %v1004 = vadd.f32 %v996, %v1002
        %1005 = vrot.lane.b32.xlu0 %v1003, 96
        %v1006 = vpop.permute.xlu0 %1005
        %1007 = vrot.lane.b32.xlu0 %v1004, 96
        %v1008 = vpop.permute.xlu0 %1007
        %vm1009 = vcmp.lt.s32.totalorder %v187, 96
        %v1010 = vsel %vm1009, %v1006, %v1008
        %v1011 = vsel %vm1009, %v1008, %v1006
        %vm1012 = vcmp.lt.s32.totalorder %v187, 224
        %vm1013 = vcmp.lt.s32.totalorder %v188, 224
        %v1014 = vsel %vm1012, %v1010, 0.0
        %v1015 = vsel %vm1013, %v1011, 0.0
        %s1016 = sld [smem:[#allocation2 + $0x2a]]
        %v1017 = vstv %s1016
        %v1018 = vmul.f32 %v1017, %v233
        %v1019 = vmul.f32 %v1017, %v234
        %s1020 = sld [smem:[#allocation2 + $0x5b]]
        %v1021 = vstv %s1020
        %v1022 = vmul.f32 %v1021, %v252
        %v1023 = vmul.f32 %v1021, %v253
        %s1024 = sld [smem:[#allocation2 + $0x2b]]
        %v1025 = vstv %s1024
        %v1026 = vmul.f32 %v1025, %v263
        %v1027 = vmul.f32 %v1025, %v264
        %v1028 = vadd.f32 %v1018, %v1026
        %v1029 = vadd.f32 %v1019, %v1027
        %s1030 = sld [smem:[#allocation2 + $0x5c]]
        %v1031 = vstv %s1030
        %v1032 = vmul.f32 %v1031, %v271
        %v1033 = vmul.f32 %v1031, %v272
        %v1034 = vadd.f32 %v1022, %v1032
        %v1035 = vadd.f32 %v1023, %v1033
        %s1036 = sld [smem:[#allocation2 + $0x2c]]
        %v1037 = vstv %s1036
        %v1038 = vmul.f32 %v1037, %v282
        %v1039 = vmul.f32 %v1037, %v283
        %v1040 = vadd.f32 %v1028, %v1038
        %v1041 = vadd.f32 %v1029, %v1039
        %s1042 = sld [smem:[#allocation2 + $0x5d]]
        %v1043 = vstv %s1042
        %v1044 = vmul.f32 %v1043, %v290
        %v1045 = vmul.f32 %v1043, %v291
        %v1046 = vadd.f32 %v1034, %v1044
        %v1047 = vadd.f32 %v1035, %v1045
        %s1048 = sld [smem:[#allocation2 + $0x2d]]
        %v1049 = vstv %s1048
        %v1050 = vmul.f32 %v1049, %v185
        %v1052 = vlaneseq
        %v1053 = vshrl.u32 %v1052, 7
        %v1054 = vsub.s32 0, %v1053
        %v1055 = vrot.slane %v1050, %v1054
        %v1056 = vlaneseq
        %v1057 = vshrl.u32 %v1056, 7
        %v1058 = vsub.s32 1, %v1057
        %v1059 = vrot.slane %v1050, %v1058
        %v1062 = vadd.f32 %v1040, %v1055
        %v1063 = vadd.f32 %v1041, %v1059
        %s1064 = sld [smem:[#allocation2 + $0x5e]]
        %v1065 = vstv %s1064
        %v1066 = vmul.f32 %v1065, %v184
        %v1068 = vlaneseq
        %v1069 = vshrl.u32 %v1068, 7
        %v1070 = vsub.s32 0, %v1069
        %v1071 = vrot.slane %v1066, %v1070
        %v1072 = vlaneseq
        %v1073 = vshrl.u32 %v1072, 7
        %v1074 = vsub.s32 1, %v1073
        %v1075 = vrot.slane %v1066, %v1074
        %v1078 = vadd.f32 %v1046, %v1071
        %v1079 = vadd.f32 %v1047, %v1075
        %s1080 = sld [smem:[#allocation2 + $0x2e]]
        %v1081 = vstv %s1080
        %v1082 = vmul.f32 %v1081, %v301
        %v1083 = vmul.f32 %v1081, %v302
        %v1084 = vadd.f32 %v1062, %v1082
        %v1085 = vadd.f32 %v1063, %v1083
        %s1086 = sld [smem:[#allocation2 + $0x5f]]
        %v1087 = vstv %s1086
        %v1088 = vmul.f32 %v1087, %v309
        %v1089 = vmul.f32 %v1087, %v310
        %v1090 = vadd.f32 %v1078, %v1088
        %v1091 = vadd.f32 %v1079, %v1089
        %s1092 = sld [smem:[#allocation2 + $0x2f]]
        %v1093 = vstv %s1092
        %v1094 = vmul.f32 %v1093, %v320
        %v1095 = vmul.f32 %v1093, %v321
        %v1096 = vadd.f32 %v1084, %v1094
        %v1097 = vadd.f32 %v1085, %v1095
        %s1098 = sld [smem:[#allocation2 + $0x60]]
        %v1099 = vstv %s1098
        %v1100 = vmul.f32 %v1099, %v328
        %v1101 = vmul.f32 %v1099, %v329
        %v1102 = vadd.f32 %v1090, %v1100
        %v1103 = vadd.f32 %v1091, %v1101
        %s1104 = sld [smem:[#allocation2 + $0x30]]
        %v1105 = vstv %s1104
        %v1106 = vmul.f32 %v1105, %v339
        %v1107 = vmul.f32 %v1105, %v340
        %v1108 = vadd.f32 %v1096, %v1106
        %v1109 = vadd.f32 %v1097, %v1107
        %s1110 = sld [smem:[#allocation2 + $0x61]]
        %v1111 = vstv %s1110
        %v1112 = vmul.f32 %v1111, %v347
        %v1113 = vmul.f32 %v1111, %v348
        %v1114 = vadd.f32 %v1102, %v1112
        %v1115 = vadd.f32 %v1103, %v1113
        %v1116 = vadd.f32 %v1108, %v1114
        %v1117 = vadd.f32 %v1109, %v1115
        %1118 = vrot.lane.b32.xlu0 %v1116, 80
        %v1119 = vpop.permute.xlu0 %1118
        %1120 = vrot.lane.b32.xlu0 %v1117, 80
        %v1121 = vpop.permute.xlu0 %1120
        %vm1122 = vcmp.lt.s32.totalorder %v187, 80
        %v1123 = vsel %vm1122, %v1119, %v1121
        %v1124 = vsel %vm1122, %v1121, %v1119
        %vm1125 = vcmp.lt.s32.totalorder %v187, 208
        %vm1126 = vcmp.lt.s32.totalorder %v188, 208
        %v1127 = vsel %vm1125, %v1123, 0.0
        %v1128 = vsel %vm1126, %v1124, 0.0
        %v1129 = vadd.f32 %v460, %v573
        %v1130 = vadd.f32 %v461, %v574
        %v1131 = vadd.f32 %v686, %v788
        %v1132 = vadd.f32 %v687, %v789
        %v1133 = vadd.f32 %v901, %v1014
        %v1134 = vadd.f32 %v902, %v1015
        %v1135 = vadd.f32 %v1129, %v1131
        %v1136 = vadd.f32 %v1130, %v1132
        %v1137 = vadd.f32 %v1133, %v1127
        %v1138 = vadd.f32 %v1134, %v1128
        %v1139 = vadd.f32 %v1135, %v1137
        %v1140 = vadd.f32 %v1136, %v1138
        %v1141 = vxor.u32 %v1139, 2147483648
        %v1142 = vxor.u32 %v1140, 2147483648
        %v1143 = vmul.f32 %v1141, 1.442695
        %v1144 = vpow.pop %v1143
        %v1145 = vmul.f32 %v1142, 1.442695
        %v1146 = vpow.pop %v1145
        %v1147 = vadd.f32 %v1144, 1.0
        %v1148 = vadd.f32 %v1146, 1.0
        %v1149 = vrcp.pop %v1147
        %v1150 = vmul.f32 1.0, %v1149
        %v1151 = vrcp.pop %v1148
        %v1152 = vmul.f32 1.0, %v1151
        %v1155 = vcombine.low %v1150, %v1152
        %v1157 = vunpack.c.l.s4 1966171168
        %v1158 = vunpack.c.0.s8 %v1157
        %v1159 = vlaneseq
        %v1160 = vshrl.u32 %v1159, 7
        %v1161 = vsub.s32 %v1158, %v1160
        %v1162 = vrot.slane %v1155, %v1161
        %v1164 = vunpack.c.l.s4 1966171168
        %v1165 = vunpack.c.0.s8 %v1164
        %v1166 = vlaneseq
        %v1167 = vshrl.u32 %v1166, 7
        %v1168 = vsub.s32 %v1165, %v1167
        %v1169 = vrot.slane %v1162, %v1168
        %v1171 = vlaneseq
        %vm1172 = vcmp.ge.s32.totalorder %v1171, 0
        %vm1173 = vcmp.lt.s32.totalorder %v1171, 256
        %vm1174 = vmand %vm1172, %vm1173
        %1175 = vst.msk [vmem:[%s171] sm:$0x3] %vm1174, %v1169
        %s1176 = sand.u32 %s75, 1
        %s1177 = scalar_lea.sflag [#allocation4], %s1176
        %s1178 = sand.u32 %s75, 1
        %s1179 = smul.addr %s1178, 2
        %s1180 = scalar_lea.vmem [#allocation7], %s1179
        // Predicated region
        $region37: #{tpu_custom_call.1} parent=27 // pred_check
          %p1181 = pneg %p85
        $region38: #{tpu_custom_call.1} parent=27 // pred_check_branch
          %1183 = sbr.rel (%p1181) target = $region40
        $region39: #{tpu_custom_call.1} parent=27 // pred_region
          %s1185 = ssub.s32 32, 32
          %1186 = vsyncadd %s1177, %s1185
          %s1187 = smul.addr %s20, 2
          %s1188 = smul.addr %s1187, 16
          %s1189 = scalar_lea.hbm %s2, %s1188
          %s1191 = sshll.u32 %s1180, 4
          %s1192 = int_to_ptr.vmem [resolvable:$true] %s1191
          %1194 = dma.vmem_to_hbm [thread:$0]  %s1192, 32, %s1189, %s1177
        $region40: #{tpu_custom_call.1} parent=27 // pred_fallthru
          _
      $region28: #{tpu_custom_call.1} parent=5 // pred_fallthru
        _
      %p1195 = scmp.le.s32.totalorder 2, %s15
      // Predicated region
      $region41: #{tpu_custom_call.1} parent=5 // pred_check
        %p1196 = pneg %p1195
      $region42: #{tpu_custom_call.1} parent=5 // pred_check_branch
        %1198 = sbr.rel (%p1196) target = $region44
      $region43: #{tpu_custom_call.1} parent=5 // pred_region
        %s1199 = ssub.s32 %s15, 2
        // Predicated region
        $region45: #{tpu_custom_call.1} parent=43 // pred_check
          %p1200 = pneg %p91
        $region46: #{tpu_custom_call.1} parent=43 // pred_check_branch
          %1202 = sbr.rel (%p1200) target = $region48
        $region47: #{tpu_custom_call.1} parent=43 // pred_region
          %s1203 = sand.u32 %s76, 1
          %s1204 = scalar_lea.sflag [#allocation4], %s1203
          %s1205 = sand.u32 %s76, 1
          %s1206 = smul.addr %s1205, 2
          %s1207 = scalar_lea.vmem [#allocation7], %s1206
          %1208 = dma.done %s1204, 32
        $region48: #{tpu_custom_call.1} parent=43 // pred_fallthru
          _
      $region44: #{tpu_custom_call.1} parent=5 // pred_fallthru
        _
    $region6: #{tpu_custom_call.1} parent=1 // loop_footer
      %s19 = sadd.s32 1, %s15
    $region7: #{tpu_custom_call.1} parent=1 // loop_footer_branch
      %14 = sbr.rel target = $region3
    $region8: #{tpu_custom_call.1} parent=1 // loop_exit
      _
    %1209 = vsyncpa [#allocation3], 1
    %s1210 = scalar_lea.sflag [#allocation3], 1
    %1211 = vsyncpa %s1210, 1
    %1212 = vsyncpa [#allocation4], 1
    %s1213 = scalar_lea.sflag [#allocation4], 1
    %1214 = vsyncpa %s1213, 1
    %1215 = vsyncpa [#allocation5], 1
    %s1216 = scalar_lea.sflag [#allocation5], 1
    %1217 = vsyncpa %s1216, 1

</llo_original>
